<compile_context>
chip_gen: v6e
topology: v6e:2x2x1
jax: 0.10.0
libtpu: 0.0.40
codegen_flags: <defaults>
</compile_context>

<pallas_src>
import jax
import jax.numpy as jnp
from jax.experimental import pallas as pl
from jax.experimental.pallas import tpu as pltpu


def _round_up(n, m):
    return ((n + m - 1) // m) * m


def _gru_attn_kernel(seq_ref, x_ref, wih_ref, whh_ref, bgi_ref, bhn_ref,
                     fnw_ref, out_ref):
    """Per-batch-tile program: full GRU over time, fn projection, masked softmax.

    Time-major layout: x_ref (S, tb, Hp), seq_ref/out_ref (S, tb).  Hp is the
    hidden size zero-padded to a multiple of 128 so each gate block [r|z|n]
    starts on a vreg (128-lane) boundary and all slices are clean selects.
    """
    S, tb, Hp = x_ref.shape

    wih = wih_ref[...]                       # (Hp, 3Hp) bf16, columns [r | z | n]
    whh = whh_ref[...]                       # (Hp, 3Hp) f32 (recurrence kept in f32)
    bgi = bgi_ref[...]                       # (1, 3Hp) f32: [b_ir+b_hr | b_iz+b_hz | b_in]
    # Loop-invariant broadcasts hoisted out of the unroll (JAX does not CSE
    # broadcast_in_dim; leaving them inside emits S copies on the serial path).
    bhn_b = jnp.broadcast_to(bhn_ref[...], (tb, Hp))      # (tb, Hp) f32
    fnw_b = jnp.broadcast_to(fnw_ref[...], (tb, Hp))      # (tb, Hp) f32

    # Input-side gate matmul hoisted out of the serial recurrence: one
    # (S*tb, Hp) x (Hp, 3Hp) MXU op.  tb is a multiple of 16, so merging the
    # (S, tb) sublanes of the bf16 block is a layout no-op.
    x_flat = x_ref[...].reshape(S * tb, Hp)
    gi = (jnp.dot(x_flat, wih, preferred_element_type=jnp.float32) + bgi
          ).reshape(S, tb, 3 * Hp)

    h = jnp.zeros((tb, Hp), jnp.float32)
    score_cols = []
    # S is small and static -> Python unroll.
    # TODO(synk): for large S, pad S to the sublane multiple and switch to
    # lax.fori_loop(..., unroll=2) with an (S, tb) VMEM scratch for the scores.
    # TODO(synk): hold the fused W_hh in the MXU across steps via
    # pltpu.matmul_push_rhs / matmul_acc_lhs / matmul_pop to drop S-1 RHS loads.
    for t in range(S):
        gi_t = gi[t]                                                # dense (tb, 3Hp) slab
        gh = jnp.dot(h, whh, preferred_element_type=jnp.float32)    # fused hidden gates
        r = jax.nn.sigmoid(gi_t[:, :Hp] + gh[:, :Hp])
        z = jax.nn.sigmoid(gi_t[:, Hp:2 * Hp] + gh[:, Hp:2 * Hp])
        n = jnp.tanh(gi_t[:, 2 * Hp:] + r * (gh[:, 2 * Hp:] + bhn_b))
        h = (1.0 - z) * n + z * h
        # fn(h_t): VPU multiply + lane reduce (XLU slot is idle during the gate
        # math), instead of an N=1 matmul or a (tb,S,H) hidden-state scratch.
        # fn bias dropped exactly: a uniform additive bias cancels in the
        # softmax and masked slots are overwritten by -9e15 anyway.
        score_cols.append(jnp.sum(h * fnw_b, axis=-1, keepdims=True))   # (tb, 1)
    # nn.Dropout is identity in eval mode (no RNG applied here).

    # Single small transpose off the per-step critical path -> (S, tb), which
    # matches the lane-dense output block.
    scores = jnp.concatenate(score_cols, axis=1).T                 # (S, tb) f32

    # torch.where(mask, alpha, -9e15) then softmax over the sequence axis.
    # TODO(synk): PyTorch upcasts to float64 before the softmax; TPU vector
    # units have no f64, so the max-subtracted softmax runs in f32.
    neg = jnp.float32(-9.0e15)
    masked = jnp.where(seq_ref[...] > 0, scores, neg)
    m = jnp.max(masked, axis=0, keepdims=True)
    e = jnp.exp(masked - m)
    denom = jnp.sum(e, axis=0, keepdims=True)
    out_ref[...] = e * pl.reciprocal(denom, approx=True)


def _batch_tile(B_pad):
    """Batch tile (lane dimension of the seq/alpha blocks).

    128-wide tiles keep the (S, tb) blocks lane-dense and layout-legal, bound
    the per-step f32 temporaries, and (when B_pad > 128) give >=2 programs so
    dimension_semantics=("parallel",) can use v7x's 2nd TensorCore.  Small /
    non-multiple batches fall back to the full padded batch (the block then
    equals the array, which is also layout-legal).
    """
    if B_pad % 128 == 0:
        return 128
    return B_pad


def init_params(key, hidden_size):
    """Deterministic parameter init mirroring nn.GRU / nn.Linear shapes."""
    ks = jax.random.split(key, 5)
    lim = 1.0 / jnp.sqrt(jnp.float32(hidden_size))

    def u(k, shape, bound):
        return jax.random.uniform(k, shape, jnp.float32, -bound, bound)

    return {
        "w_ih": u(ks[0], (3 * hidden_size, hidden_size), lim),   # rows [r|z|n]
        "w_hh": u(ks[1], (3 * hidden_size, hidden_size), lim),
        "b_ih": u(ks[2], (3 * hidden_size,), lim),
        "b_hh": u(ks[3], (3 * hidden_size,), lim),
        # fn: nn.Linear(H, 1), xavier_uniform_ weight, zero bias.
        "fn_w": u(ks[4], (1, hidden_size), jnp.sqrt(6.0 / (hidden_size + 1))),
        "fn_b": jnp.zeros((1,), jnp.float32),
    }


def rnn_net_forward(item_seq, x, params):
    """Pallas-backed equivalent of RNNNet.forward(item_seq, x) (eval mode)."""
    B, S, H = x.shape
    Hp = _round_up(H, 128)        # pad hidden width to a 128-lane boundary per gate
    B_pad = _round_up(B, 16)      # sublane/bf16-packing aligned batch
    tb = _batch_tile(B_pad)
    H3 = 3 * Hp

    def fused_gate_weight(w):     # (3H, H) rows [r|z|n] -> padded fused (Hp, 3Hp) W^T
        out = jnp.zeros((Hp, H3), jnp.float32)
        for g in range(3):
            out = out.at[:H, g * Hp:g * Hp + H].set(w[g * H:(g + 1) * H, :].T)
        return out

    def pad_gate_bias(vals):      # 3 x (H,) -> (1, 3Hp), zero in padded lanes
        out = jnp.zeros((1, H3), jnp.float32)
        for g, v in enumerate(vals):
            out = out.at[0, g * Hp:g * Hp + H].set(v)
        return out

    b_ih, b_hh = params["b_ih"], params["b_hh"]
    b_ir, b_iz, b_in = b_ih[:H], b_ih[H:2 * H], b_ih[2 * H:]
    b_hr, b_hz, b_hn = b_hh[:H], b_hh[H:2 * H], b_hh[2 * H:]

    # bf16 MXU operand for the hoisted (non-compounding) input matmul; the
    # hidden-side weights stay f32 so rounding does not compound through the
    # serial recurrence.  Zero padding keeps padded channels exactly zero.
    wih_t = fused_gate_weight(params["w_ih"]).astype(jnp.bfloat16)
    whh_t = fused_gate_weight(params["w_hh"])
    # r/z biases fold into the input-side matmul bias; b_hn stays separate
    # (it is multiplied by r inside the n gate).
    bgi = pad_gate_bias([b_ir + b_hr, b_iz + b_hz, b_in])
    bhn = jnp.zeros((1, Hp), jnp.float32).at[0, :H].set(b_hn)
    fnw = jnp.zeros((1, Hp), jnp.float32).at[0, :H].set(params["fn_w"].reshape(H))
    # fn bias intentionally not passed (softmax-invariant, see kernel comment).

    # Time-major, padded operands (one-time XLA layout work outside the kernel;
    # padded batch rows have item_seq == 0, so they are fully masked and sliced off).
    x_p = jnp.pad(x.astype(jnp.float32), ((0, B_pad - B), (0, 0), (0, Hp - H)))
    x_p = jnp.transpose(x_p, (1, 0, 2)).astype(jnp.bfloat16)            # (S, B_pad, Hp)
    seq_p = jnp.pad(item_seq.astype(jnp.int32), ((0, B_pad - B), (0, 0))).T  # (S, B_pad)

    # Explicit VMEM budget: double-buffered streamed blocks + resident weights
    # + the f32 gi temporary.  Re-derive per generation (v7x: 64 MiB physical,
    # v5e: 16 MiB scoped default, v6e: 128 MiB physical).
    blk_bytes = S * tb * (Hp * 2 + 4 + 4)                 # x (bf16) + seq + alpha
    w_bytes = Hp * H3 * (2 + 4) + (H3 + 2 * Hp) * 4
    gi_bytes = S * tb * H3 * 4
    vmem_limit = int(min(64 << 20,
                         max(16 << 20,
                             2 * blk_bytes + w_bytes + 4 * gi_bytes + (4 << 20))))

    grid_spec = pltpu.PrefetchScalarGridSpec(
        num_scalar_prefetch=0,
        grid=(B_pad // tb,),
        in_specs=[
            pl.BlockSpec((S, tb), lambda i: (0, i)),           # item_seq (time-major)
            pl.BlockSpec((S, tb, Hp), lambda i: (0, i, 0)),    # x (time-major, padded)
            pl.BlockSpec((Hp, H3), lambda i: (0, 0)),          # W_ih^T (fused, padded)
            pl.BlockSpec((Hp, H3), lambda i: (0, 0)),          # W_hh^T (fused, padded)
            pl.BlockSpec((1, H3), lambda i: (0, 0)),           # folded gate bias
            pl.BlockSpec((1, Hp), lambda i: (0, 0)),           # b_hn
            pl.BlockSpec((1, Hp), lambda i: (0, 0)),           # fn weight
        ],
        out_specs=pl.BlockSpec((S, tb), lambda i: (0, i)),     # alpha, lane-dense
    )

    alpha_sb = pl.pallas_call(
        _gru_attn_kernel,
        grid_spec=grid_spec,
        out_shape=jax.ShapeDtypeStruct((S, B_pad), jnp.float32),
        compiler_params=pltpu.CompilerParams(
            # Independent batch tiles -> shard across TensorCores on v7x;
            # just a serial loop on single-TC v5e/v6e.
            dimension_semantics=("parallel",),
            vmem_limit_bytes=vmem_limit),
    )(seq_p, x_p, wih_t, whh_t, bgi, bhn, fnw)

    alpha = jnp.transpose(alpha_sb)[:B]                         # (B, S)
    return alpha[..., None].astype(jnp.float32)                 # (B, S, 1)


def _reference_forward(item_seq, x, params):
    """Pure-JAX f32 reference of the same forward pass (correctness check)."""
    B, S, H = x.shape
    w_ih, w_hh = params["w_ih"], params["w_hh"]
    b_ih, b_hh = params["b_ih"], params["b_hh"]
    h = jnp.zeros((B, H), jnp.float32)
    outs = []
    for t in range(S):
        x_t = x[:, t, :]
        gi = x_t @ w_ih.T + b_ih
        gh = h @ w_hh.T + b_hh
        i_r, i_z, i_n = gi[:, :H], gi[:, H:2 * H], gi[:, 2 * H:]
        h_r, h_z, h_n = gh[:, :H], gh[:, H:2 * H], gh[:, 2 * H:]
        r = jax.nn.sigmoid(i_r + h_r)
        z = jax.nn.sigmoid(i_z + h_z)
        n = jnp.tanh(i_n + r * h_n)
        h = (1.0 - z) * n + z * h
        outs.append(h)
    out = jnp.stack(outs, axis=1)                                # (B, S, H)
    alpha = out @ params["fn_w"].T + params["fn_b"]              # (B, S, 1)
    mask = (item_seq > 0)[..., None]
    alpha = jnp.where(mask, alpha, jnp.float32(-9.0e15))
    return jax.nn.softmax(alpha, axis=1)


if __name__ == "__main__":
    B, S, H = 2, 8, 32                       # batch, seq, embedding_size
    key = jax.random.PRNGKey(0)
    k_params, k_x, k_seq = jax.random.split(key, 3)

    params = init_params(k_params, H)
    x = jax.random.normal(k_x, (B, S, H), jnp.float32)
    # item_seq with some zeros so the mask path is exercised.
    item_seq = jax.random.randint(k_seq, (B, S), 0, 5, jnp.int32)

    alpha = jax.block_until_ready(rnn_net_forward(item_seq, x, params))

    ref = _reference_forward(item_seq, x, params)
    assert alpha.shape == (B, S, 1) and alpha.dtype == jnp.float32
    # Input-side matmul runs in bf16 (f32 accumulation); recurrence and softmax
    # stay f32.  Compare against the pure-f32 reference with relaxed tolerance.
    assert float(jnp.max(jnp.abs(alpha - ref))) < 2e-2, "mismatch vs JAX reference"

    print("KERNEL_OK")
</pallas_src>

<mosaic_0001>
module attributes {stable_mosaic.version = 11 : i64} {
  func.func @_gru_attn_kernel(%arg0: i32, %arg1: memref<8x16xi32, #tpu.memory_space<vmem>>, %arg2: memref<8x16x128xbf16, #tpu.memory_space<vmem>>, %arg3: memref<128x384xbf16, #tpu.memory_space<vmem>>, %arg4: memref<128x384xf32, #tpu.memory_space<vmem>>, %arg5: memref<1x384xf32, #tpu.memory_space<vmem>>, %arg6: memref<1x128xf32, #tpu.memory_space<vmem>>, %arg7: memref<1x128xf32, #tpu.memory_space<vmem>>, %arg8: memref<8x16xf32, #tpu.memory_space<vmem>>) attributes {dimension_semantics = [#tpu.dimension_semantics<parallel>], iteration_bounds = array<i64: 1>, scalar_prefetch = 0 : i64, scratch_operands = 0 : i64, tpu.core_type = #tpu.core_type<tc>, window_params = [{transform_indices = @transform_0, window_bounds = array<i64: 8, 16>}, {transform_indices = @transform_1, window_bounds = array<i64: 8, 16, 128>}, {pipeline_mode = #tpu.pipeline_mode<synchronous>, transform_indices = @transform_2, window_bounds = array<i64: 128, 384>}, {pipeline_mode = #tpu.pipeline_mode<synchronous>, transform_indices = @transform_3, window_bounds = array<i64: 128, 384>}, {pipeline_mode = #tpu.pipeline_mode<synchronous>, transform_indices = @transform_4, window_bounds = array<i64: 1, 384>}, {pipeline_mode = #tpu.pipeline_mode<synchronous>, transform_indices = @transform_5, window_bounds = array<i64: 1, 128>}, {pipeline_mode = #tpu.pipeline_mode<synchronous>, transform_indices = @transform_6, window_bounds = array<i64: 1, 128>}, {transform_indices = @transform_7, window_bounds = array<i64: 8, 16>}]} {
    %c0 = arith.constant 0 : index
    %c0_0 = arith.constant 0 : index
    %0 = vector.load %arg3[%c0, %c0_0] : memref<128x384xbf16, #tpu.memory_space<vmem>>, vector<128x384xbf16>
    %c0_1 = arith.constant 0 : index
    %c0_2 = arith.constant 0 : index
    %1 = vector.load %arg4[%c0_1, %c0_2] : memref<128x384xf32, #tpu.memory_space<vmem>>, vector<128x384xf32>
    %c0_3 = arith.constant 0 : index
    %c0_4 = arith.constant 0 : index
    %2 = vector.load %arg5[%c0_3, %c0_4] : memref<1x384xf32, #tpu.memory_space<vmem>>, vector<1x384xf32>
    %c0_5 = arith.constant 0 : index
    %c0_6 = arith.constant 0 : index
    %3 = vector.load %arg6[%c0_5, %c0_6] : memref<1x128xf32, #tpu.memory_space<vmem>>, vector<1x128xf32>
    %4 = vector.shape_cast %3 : vector<1x128xf32> to vector<1x128xf32>
    %5 = vector.broadcast %4 : vector<1x128xf32> to vector<16x128xf32>
    %c0_7 = arith.constant 0 : index
    %c0_8 = arith.constant 0 : index
    %6 = vector.load %arg7[%c0_7, %c0_8] : memref<1x128xf32, #tpu.memory_space<vmem>>, vector<1x128xf32>
    %7 = vector.shape_cast %6 : vector<1x128xf32> to vector<1x128xf32>
    %8 = vector.broadcast %7 : vector<1x128xf32> to vector<16x128xf32>
    %c0_9 = arith.constant 0 : index
    %c0_10 = arith.constant 0 : index
    %c0_11 = arith.constant 0 : index
    %9 = vector.load %arg2[%c0_9, %c0_10, %c0_11] : memref<8x16x128xbf16, #tpu.memory_space<vmem>>, vector<8x16x128xbf16>
    %10 = vector.shape_cast %9 : vector<8x16x128xbf16> to vector<128x128xbf16>
    %cst = arith.constant dense<0.000000e+00> : vector<128x384xf32>
    %11 = tpu.matmul %10, %0, %cst {dimension_numbers = #tpu.dot_dimension_numbers<[1], [0], [0], [1], [0, 0, 1, 1], [], []>} : vector<128x128xbf16>, vector<128x384xbf16>, vector<128x384xf32> -> vector<128x384xf32>
    %12 = vector.broadcast %2 : vector<1x384xf32> to vector<128x384xf32>
    %13 = arith.addf %11, %12 : vector<128x384xf32>
    %14 = vector.shape_cast %13 : vector<128x384xf32> to vector<8x16x384xf32>
    %cst_12 = arith.constant 0.000000e+00 : f32
    %15 = vector.broadcast %cst_12 : f32 to vector<16x128xf32>
    %16 = vector.extract_strided_slice %14 {offsets = [0, 0, 0], sizes = [1, 16, 384], strides = [1, 1, 1]} : vector<8x16x384xf32> to vector<1x16x384xf32>
    %17 = vector.shape_cast %16 : vector<1x16x384xf32> to vector<16x384xf32>
    %cst_13 = arith.constant dense<0.000000e+00> : vector<16x384xf32>
    %18 = tpu.matmul %15, %1, %cst_13 {dimension_numbers = #tpu.dot_dimension_numbers<[1], [0], [0], [1], [0, 0, 1, 1], [], []>} : vector<16x128xf32>, vector<128x384xf32>, vector<16x384xf32> -> vector<16x384xf32>
    %19 = vector.extract_strided_slice %17 {offsets = [0, 0], sizes = [16, 128], strides = [1, 1]} : vector<16x384xf32> to vector<16x128xf32>
    %20 = vector.extract_strided_slice %18 {offsets = [0, 0], sizes = [16, 128], strides = [1, 1]} : vector<16x384xf32> to vector<16x128xf32>
    %21 = arith.addf %19, %20 : vector<16x128xf32>
    %22 = arith.negf %21 : vector<16x128xf32>
    %23 = math.exp %22 : vector<16x128xf32>
    %cst_14 = arith.constant 1.000000e+00 : f32
    %24 = vector.broadcast %cst_14 : f32 to vector<16x128xf32>
    %25 = arith.addf %24, %23 : vector<16x128xf32>
    %26 = arith.divf %24, %25 : vector<16x128xf32>
    %27 = vector.extract_strided_slice %17 {offsets = [0, 128], sizes = [16, 128], strides = [1, 1]} : vector<16x384xf32> to vector<16x128xf32>
    %28 = vector.extract_strided_slice %18 {offsets = [0, 128], sizes = [16, 128], strides = [1, 1]} : vector<16x384xf32> to vector<16x128xf32>
    %29 = arith.addf %27, %28 : vector<16x128xf32>
    %30 = arith.negf %29 : vector<16x128xf32>
    %31 = math.exp %30 : vector<16x128xf32>
    %cst_15 = arith.constant 1.000000e+00 : f32
    %32 = vector.broadcast %cst_15 : f32 to vector<16x128xf32>
    %33 = arith.addf %32, %31 : vector<16x128xf32>
    %34 = arith.divf %32, %33 : vector<16x128xf32>
    %35 = vector.extract_strided_slice %17 {offsets = [0, 256], sizes = [16, 128], strides = [1, 1]} : vector<16x384xf32> to vector<16x128xf32>
    %36 = vector.extract_strided_slice %18 {offsets = [0, 256], sizes = [16, 128], strides = [1, 1]} : vector<16x384xf32> to vector<16x128xf32>
    %37 = arith.addf %36, %5 : vector<16x128xf32>
    %38 = arith.mulf %26, %37 : vector<16x128xf32>
    %39 = arith.addf %35, %38 : vector<16x128xf32>
    %40 = math.tanh %39 : vector<16x128xf32>
    %cst_16 = arith.constant 1.000000e+00 : f32
    %41 = vector.broadcast %cst_16 : f32 to vector<16x128xf32>
    %42 = arith.subf %41, %34 : vector<16x128xf32>
    %43 = arith.mulf %42, %40 : vector<16x128xf32>
    %44 = arith.mulf %34, %15 : vector<16x128xf32>
    %45 = arith.addf %43, %44 : vector<16x128xf32>
    %46 = arith.mulf %45, %8 : vector<16x128xf32>
    %cst_17 = arith.constant dense<0.000000e+00> : vector<16xf32>
    %47 = vector.multi_reduction <add>, %46, %cst_17 [1] : vector<16x128xf32> to vector<16xf32>
    %48 = vector.shape_cast %47 : vector<16xf32> to vector<16x1xf32>
    %49 = vector.extract_strided_slice %14 {offsets = [1, 0, 0], sizes = [1, 16, 384], strides = [1, 1, 1]} : vector<8x16x384xf32> to vector<1x16x384xf32>
    %50 = vector.shape_cast %49 : vector<1x16x384xf32> to vector<16x384xf32>
    %cst_18 = arith.constant dense<0.000000e+00> : vector<16x384xf32>
    %51 = tpu.matmul %45, %1, %cst_18 {dimension_numbers = #tpu.dot_dimension_numbers<[1], [0], [0], [1], [0, 0, 1, 1], [], []>} : vector<16x128xf32>, vector<128x384xf32>, vector<16x384xf32> -> vector<16x384xf32>
    %52 = vector.extract_strided_slice %50 {offsets = [0, 0], sizes = [16, 128], strides = [1, 1]} : vector<16x384xf32> to vector<16x128xf32>
    %53 = vector.extract_strided_slice %51 {offsets = [0, 0], sizes = [16, 128], strides = [1, 1]} : vector<16x384xf32> to vector<16x128xf32>
    %54 = arith.addf %52, %53 : vector<16x128xf32>
    %55 = arith.negf %54 : vector<16x128xf32>
    %56 = math.exp %55 : vector<16x128xf32>
    %cst_19 = arith.constant 1.000000e+00 : f32
    %57 = vector.broadcast %cst_19 : f32 to vector<16x128xf32>
    %58 = arith.addf %57, %56 : vector<16x128xf32>
    %59 = arith.divf %57, %58 : vector<16x128xf32>
    %60 = vector.extract_strided_slice %50 {offsets = [0, 128], sizes = [16, 128], strides = [1, 1]} : vector<16x384xf32> to vector<16x128xf32>
    %61 = vector.extract_strided_slice %51 {offsets = [0, 128], sizes = [16, 128], strides = [1, 1]} : vector<16x384xf32> to vector<16x128xf32>
    %62 = arith.addf %60, %61 : vector<16x128xf32>
    %63 = arith.negf %62 : vector<16x128xf32>
    %64 = math.exp %63 : vector<16x128xf32>
    %cst_20 = arith.constant 1.000000e+00 : f32
    %65 = vector.broadcast %cst_20 : f32 to vector<16x128xf32>
    %66 = arith.addf %65, %64 : vector<16x128xf32>
    %67 = arith.divf %65, %66 : vector<16x128xf32>
    %68 = vector.extract_strided_slice %50 {offsets = [0, 256], sizes = [16, 128], strides = [1, 1]} : vector<16x384xf32> to vector<16x128xf32>
    %69 = vector.extract_strided_slice %51 {offsets = [0, 256], sizes = [16, 128], strides = [1, 1]} : vector<16x384xf32> to vector<16x128xf32>
    %70 = arith.addf %69, %5 : vector<16x128xf32>
    %71 = arith.mulf %59, %70 : vector<16x128xf32>
    %72 = arith.addf %68, %71 : vector<16x128xf32>
    %73 = math.tanh %72 : vector<16x128xf32>
    %cst_21 = arith.constant 1.000000e+00 : f32
    %74 = vector.broadcast %cst_21 : f32 to vector<16x128xf32>
    %75 = arith.subf %74, %67 : vector<16x128xf32>
    %76 = arith.mulf %75, %73 : vector<16x128xf32>
    %77 = arith.mulf %67, %45 : vector<16x128xf32>
    %78 = arith.addf %76, %77 : vector<16x128xf32>
    %79 = arith.mulf %78, %8 : vector<16x128xf32>
    %cst_22 = arith.constant dense<0.000000e+00> : vector<16xf32>
    %80 = vector.multi_reduction <add>, %79, %cst_22 [1] : vector<16x128xf32> to vector<16xf32>
    %81 = vector.shape_cast %80 : vector<16xf32> to vector<16x1xf32>
    %82 = vector.extract_strided_slice %14 {offsets = [2, 0, 0], sizes = [1, 16, 384], strides = [1, 1, 1]} : vector<8x16x384xf32> to vector<1x16x384xf32>
    %83 = vector.shape_cast %82 : vector<1x16x384xf32> to vector<16x384xf32>
    %cst_23 = arith.constant dense<0.000000e+00> : vector<16x384xf32>
    %84 = tpu.matmul %78, %1, %cst_23 {dimension_numbers = #tpu.dot_dimension_numbers<[1], [0], [0], [1], [0, 0, 1, 1], [], []>} : vector<16x128xf32>, vector<128x384xf32>, vector<16x384xf32> -> vector<16x384xf32>
    %85 = vector.extract_strided_slice %83 {offsets = [0, 0], sizes = [16, 128], strides = [1, 1]} : vector<16x384xf32> to vector<16x128xf32>
    %86 = vector.extract_strided_slice %84 {offsets = [0, 0], sizes = [16, 128], strides = [1, 1]} : vector<16x384xf32> to vector<16x128xf32>
    %87 = arith.addf %85, %86 : vector<16x128xf32>
    %88 = arith.negf %87 : vector<16x128xf32>
    %89 = math.exp %88 : vector<16x128xf32>
    %cst_24 = arith.constant 1.000000e+00 : f32
    %90 = vector.broadcast %cst_24 : f32 to vector<16x128xf32>
    %91 = arith.addf %90, %89 : vector<16x128xf32>
    %92 = arith.divf %90, %91 : vector<16x128xf32>
    %93 = vector.extract_strided_slice %83 {offsets = [0, 128], sizes = [16, 128], strides = [1, 1]} : vector<16x384xf32> to vector<16x128xf32>
    %94 = vector.extract_strided_slice %84 {offsets = [0, 128], sizes = [16, 128], strides = [1, 1]} : vector<16x384xf32> to vector<16x128xf32>
    %95 = arith.addf %93, %94 : vector<16x128xf32>
    %96 = arith.negf %95 : vector<16x128xf32>
    %97 = math.exp %96 : vector<16x128xf32>
    %cst_25 = arith.constant 1.000000e+00 : f32
    %98 = vector.broadcast %cst_25 : f32 to vector<16x128xf32>
    %99 = arith.addf %98, %97 : vector<16x128xf32>
    %100 = arith.divf %98, %99 : vector<16x128xf32>
    %101 = vector.extract_strided_slice %83 {offsets = [0, 256], sizes = [16, 128], strides = [1, 1]} : vector<16x384xf32> to vector<16x128xf32>
    %102 = vector.extract_strided_slice %84 {offsets = [0, 256], sizes = [16, 128], strides = [1, 1]} : vector<16x384xf32> to vector<16x128xf32>
    %103 = arith.addf %102, %5 : vector<16x128xf32>
    %104 = arith.mulf %92, %103 : vector<16x128xf32>
    %105 = arith.addf %101, %104 : vector<16x128xf32>
    %106 = math.tanh %105 : vector<16x128xf32>
    %cst_26 = arith.constant 1.000000e+00 : f32
    %107 = vector.broadcast %cst_26 : f32 to vector<16x128xf32>
    %108 = arith.subf %107, %100 : vector<16x128xf32>
    %109 = arith.mulf %108, %106 : vector<16x128xf32>
    %110 = arith.mulf %100, %78 : vector<16x128xf32>
    %111 = arith.addf %109, %110 : vector<16x128xf32>
    %112 = arith.mulf %111, %8 : vector<16x128xf32>
    %cst_27 = arith.constant dense<0.000000e+00> : vector<16xf32>
    %113 = vector.multi_reduction <add>, %112, %cst_27 [1] : vector<16x128xf32> to vector<16xf32>
    %114 = vector.shape_cast %113 : vector<16xf32> to vector<16x1xf32>
    %115 = vector.extract_strided_slice %14 {offsets = [3, 0, 0], sizes = [1, 16, 384], strides = [1, 1, 1]} : vector<8x16x384xf32> to vector<1x16x384xf32>
    %116 = vector.shape_cast %115 : vector<1x16x384xf32> to vector<16x384xf32>
    %cst_28 = arith.constant dense<0.000000e+00> : vector<16x384xf32>
    %117 = tpu.matmul %111, %1, %cst_28 {dimension_numbers = #tpu.dot_dimension_numbers<[1], [0], [0], [1], [0, 0, 1, 1], [], []>} : vector<16x128xf32>, vector<128x384xf32>, vector<16x384xf32> -> vector<16x384xf32>
    %118 = vector.extract_strided_slice %116 {offsets = [0, 0], sizes = [16, 128], strides = [1, 1]} : vector<16x384xf32> to vector<16x128xf32>
    %119 = vector.extract_strided_slice %117 {offsets = [0, 0], sizes = [16, 128], strides = [1, 1]} : vector<16x384xf32> to vector<16x128xf32>
    %120 = arith.addf %118, %119 : vector<16x128xf32>
    %121 = arith.negf %120 : vector<16x128xf32>
    %122 = math.exp %121 : vector<16x128xf32>
    %cst_29 = arith.constant 1.000000e+00 : f32
    %123 = vector.broadcast %cst_29 : f32 to vector<16x128xf32>
    %124 = arith.addf %123, %122 : vector<16x128xf32>
    %125 = arith.divf %123, %124 : vector<16x128xf32>
    %126 = vector.extract_strided_slice %116 {offsets = [0, 128], sizes = [16, 128], strides = [1, 1]} : vector<16x384xf32> to vector<16x128xf32>
    %127 = vector.extract_strided_slice %117 {offsets = [0, 128], sizes = [16, 128], strides = [1, 1]} : vector<16x384xf32> to vector<16x128xf32>
    %128 = arith.addf %126, %127 : vector<16x128xf32>
    %129 = arith.negf %128 : vector<16x128xf32>
    %130 = math.exp %129 : vector<16x128xf32>
    %cst_30 = arith.constant 1.000000e+00 : f32
    %131 = vector.broadcast %cst_30 : f32 to vector<16x128xf32>
    %132 = arith.addf %131, %130 : vector<16x128xf32>
    %133 = arith.divf %131, %132 : vector<16x128xf32>
    %134 = vector.extract_strided_slice %116 {offsets = [0, 256], sizes = [16, 128], strides = [1, 1]} : vector<16x384xf32> to vector<16x128xf32>
    %135 = vector.extract_strided_slice %117 {offsets = [0, 256], sizes = [16, 128], strides = [1, 1]} : vector<16x384xf32> to vector<16x128xf32>
    %136 = arith.addf %135, %5 : vector<16x128xf32>
    %137 = arith.mulf %125, %136 : vector<16x128xf32>
    %138 = arith.addf %134, %137 : vector<16x128xf32>
    %139 = math.tanh %138 : vector<16x128xf32>
    %cst_31 = arith.constant 1.000000e+00 : f32
    %140 = vector.broadcast %cst_31 : f32 to vector<16x128xf32>
    %141 = arith.subf %140, %133 : vector<16x128xf32>
    %142 = arith.mulf %141, %139 : vector<16x128xf32>
    %143 = arith.mulf %133, %111 : vector<16x128xf32>
    %144 = arith.addf %142, %143 : vector<16x128xf32>
    %145 = arith.mulf %144, %8 : vector<16x128xf32>
    %cst_32 = arith.constant dense<0.000000e+00> : vector<16xf32>
    %146 = vector.multi_reduction <add>, %145, %cst_32 [1] : vector<16x128xf32> to vector<16xf32>
    %147 = vector.shape_cast %146 : vector<16xf32> to vector<16x1xf32>
    %148 = vector.extract_strided_slice %14 {offsets = [4, 0, 0], sizes = [1, 16, 384], strides = [1, 1, 1]} : vector<8x16x384xf32> to vector<1x16x384xf32>
    %149 = vector.shape_cast %148 : vector<1x16x384xf32> to vector<16x384xf32>
    %cst_33 = arith.constant dense<0.000000e+00> : vector<16x384xf32>
    %150 = tpu.matmul %144, %1, %cst_33 {dimension_numbers = #tpu.dot_dimension_numbers<[1], [0], [0], [1], [0, 0, 1, 1], [], []>} : vector<16x128xf32>, vector<128x384xf32>, vector<16x384xf32> -> vector<16x384xf32>
    %151 = vector.extract_strided_slice %149 {offsets = [0, 0], sizes = [16, 128], strides = [1, 1]} : vector<16x384xf32> to vector<16x128xf32>
    %152 = vector.extract_strided_slice %150 {offsets = [0, 0], sizes = [16, 128], strides = [1, 1]} : vector<16x384xf32> to vector<16x128xf32>
    %153 = arith.addf %151, %152 : vector<16x128xf32>
    %154 = arith.negf %153 : vector<16x128xf32>
    %155 = math.exp %154 : vector<16x128xf32>
    %cst_34 = arith.constant 1.000000e+00 : f32
    %156 = vector.broadcast %cst_34 : f32 to vector<16x128xf32>
    %157 = arith.addf %156, %155 : vector<16x128xf32>
    %158 = arith.divf %156, %157 : vector<16x128xf32>
    %159 = vector.extract_strided_slice %149 {offsets = [0, 128], sizes = [16, 128], strides = [1, 1]} : vector<16x384xf32> to vector<16x128xf32>
    %160 = vector.extract_strided_slice %150 {offsets = [0, 128], sizes = [16, 128], strides = [1, 1]} : vector<16x384xf32> to vector<16x128xf32>
    %161 = arith.addf %159, %160 : vector<16x128xf32>
    %162 = arith.negf %161 : vector<16x128xf32>
    %163 = math.exp %162 : vector<16x128xf32>
    %cst_35 = arith.constant 1.000000e+00 : f32
    %164 = vector.broadcast %cst_35 : f32 to vector<16x128xf32>
    %165 = arith.addf %164, %163 : vector<16x128xf32>
    %166 = arith.divf %164, %165 : vector<16x128xf32>
    %167 = vector.extract_strided_slice %149 {offsets = [0, 256], sizes = [16, 128], strides = [1, 1]} : vector<16x384xf32> to vector<16x128xf32>
    %168 = vector.extract_strided_slice %150 {offsets = [0, 256], sizes = [16, 128], strides = [1, 1]} : vector<16x384xf32> to vector<16x128xf32>
    %169 = arith.addf %168, %5 : vector<16x128xf32>
    %170 = arith.mulf %158, %169 : vector<16x128xf32>
    %171 = arith.addf %167, %170 : vector<16x128xf32>
    %172 = math.tanh %171 : vector<16x128xf32>
    %cst_36 = arith.constant 1.000000e+00 : f32
    %173 = vector.broadcast %cst_36 : f32 to vector<16x128xf32>
    %174 = arith.subf %173, %166 : vector<16x128xf32>
    %175 = arith.mulf %174, %172 : vector<16x128xf32>
    %176 = arith.mulf %166, %144 : vector<16x128xf32>
    %177 = arith.addf %175, %176 : vector<16x128xf32>
    %178 = arith.mulf %177, %8 : vector<16x128xf32>
    %cst_37 = arith.constant dense<0.000000e+00> : vector<16xf32>
    %179 = vector.multi_reduction <add>, %178, %cst_37 [1] : vector<16x128xf32> to vector<16xf32>
    %180 = vector.shape_cast %179 : vector<16xf32> to vector<16x1xf32>
    %181 = vector.extract_strided_slice %14 {offsets = [5, 0, 0], sizes = [1, 16, 384], strides = [1, 1, 1]} : vector<8x16x384xf32> to vector<1x16x384xf32>
    %182 = vector.shape_cast %181 : vector<1x16x384xf32> to vector<16x384xf32>
    %cst_38 = arith.constant dense<0.000000e+00> : vector<16x384xf32>
    %183 = tpu.matmul %177, %1, %cst_38 {dimension_numbers = #tpu.dot_dimension_numbers<[1], [0], [0], [1], [0, 0, 1, 1], [], []>} : vector<16x128xf32>, vector<128x384xf32>, vector<16x384xf32> -> vector<16x384xf32>
    %184 = vector.extract_strided_slice %182 {offsets = [0, 0], sizes = [16, 128], strides = [1, 1]} : vector<16x384xf32> to vector<16x128xf32>
    %185 = vector.extract_strided_slice %183 {offsets = [0, 0], sizes = [16, 128], strides = [1, 1]} : vector<16x384xf32> to vector<16x128xf32>
    %186 = arith.addf %184, %185 : vector<16x128xf32>
    %187 = arith.negf %186 : vector<16x128xf32>
    %188 = math.exp %187 : vector<16x128xf32>
    %cst_39 = arith.constant 1.000000e+00 : f32
    %189 = vector.broadcast %cst_39 : f32 to vector<16x128xf32>
    %190 = arith.addf %189, %188 : vector<16x128xf32>
    %191 = arith.divf %189, %190 : vector<16x128xf32>
    %192 = vector.extract_strided_slice %182 {offsets = [0, 128], sizes = [16, 128], strides = [1, 1]} : vector<16x384xf32> to vector<16x128xf32>
    %193 = vector.extract_strided_slice %183 {offsets = [0, 128], sizes = [16, 128], strides = [1, 1]} : vector<16x384xf32> to vector<16x128xf32>
    %194 = arith.addf %192, %193 : vector<16x128xf32>
    %195 = arith.negf %194 : vector<16x128xf32>
    %196 = math.exp %195 : vector<16x128xf32>
    %cst_40 = arith.constant 1.000000e+00 : f32
    %197 = vector.broadcast %cst_40 : f32 to vector<16x128xf32>
    %198 = arith.addf %197, %196 : vector<16x128xf32>
    %199 = arith.divf %197, %198 : vector<16x128xf32>
    %200 = vector.extract_strided_slice %182 {offsets = [0, 256], sizes = [16, 128], strides = [1, 1]} : vector<16x384xf32> to vector<16x128xf32>
    %201 = vector.extract_strided_slice %183 {offsets = [0, 256], sizes = [16, 128], strides = [1, 1]} : vector<16x384xf32> to vector<16x128xf32>
    %202 = arith.addf %201, %5 : vector<16x128xf32>
    %203 = arith.mulf %191, %202 : vector<16x128xf32>
    %204 = arith.addf %200, %203 : vector<16x128xf32>
    %205 = math.tanh %204 : vector<16x128xf32>
    %cst_41 = arith.constant 1.000000e+00 : f32
    %206 = vector.broadcast %cst_41 : f32 to vector<16x128xf32>
    %207 = arith.subf %206, %199 : vector<16x128xf32>
    %208 = arith.mulf %207, %205 : vector<16x128xf32>
    %209 = arith.mulf %199, %177 : vector<16x128xf32>
    %210 = arith.addf %208, %209 : vector<16x128xf32>
    %211 = arith.mulf %210, %8 : vector<16x128xf32>
    %cst_42 = arith.constant dense<0.000000e+00> : vector<16xf32>
    %212 = vector.multi_reduction <add>, %211, %cst_42 [1] : vector<16x128xf32> to vector<16xf32>
    %213 = vector.shape_cast %212 : vector<16xf32> to vector<16x1xf32>
    %214 = vector.extract_strided_slice %14 {offsets = [6, 0, 0], sizes = [1, 16, 384], strides = [1, 1, 1]} : vector<8x16x384xf32> to vector<1x16x384xf32>
    %215 = vector.shape_cast %214 : vector<1x16x384xf32> to vector<16x384xf32>
    %cst_43 = arith.constant dense<0.000000e+00> : vector<16x384xf32>
    %216 = tpu.matmul %210, %1, %cst_43 {dimension_numbers = #tpu.dot_dimension_numbers<[1], [0], [0], [1], [0, 0, 1, 1], [], []>} : vector<16x128xf32>, vector<128x384xf32>, vector<16x384xf32> -> vector<16x384xf32>
    %217 = vector.extract_strided_slice %215 {offsets = [0, 0], sizes = [16, 128], strides = [1, 1]} : vector<16x384xf32> to vector<16x128xf32>
    %218 = vector.extract_strided_slice %216 {offsets = [0, 0], sizes = [16, 128], strides = [1, 1]} : vector<16x384xf32> to vector<16x128xf32>
    %219 = arith.addf %217, %218 : vector<16x128xf32>
    %220 = arith.negf %219 : vector<16x128xf32>
    %221 = math.exp %220 : vector<16x128xf32>
    %cst_44 = arith.constant 1.000000e+00 : f32
    %222 = vector.broadcast %cst_44 : f32 to vector<16x128xf32>
    %223 = arith.addf %222, %221 : vector<16x128xf32>
    %224 = arith.divf %222, %223 : vector<16x128xf32>
    %225 = vector.extract_strided_slice %215 {offsets = [0, 128], sizes = [16, 128], strides = [1, 1]} : vector<16x384xf32> to vector<16x128xf32>
    %226 = vector.extract_strided_slice %216 {offsets = [0, 128], sizes = [16, 128], strides = [1, 1]} : vector<16x384xf32> to vector<16x128xf32>
    %227 = arith.addf %225, %226 : vector<16x128xf32>
    %228 = arith.negf %227 : vector<16x128xf32>
    %229 = math.exp %228 : vector<16x128xf32>
    %cst_45 = arith.constant 1.000000e+00 : f32
    %230 = vector.broadcast %cst_45 : f32 to vector<16x128xf32>
    %231 = arith.addf %230, %229 : vector<16x128xf32>
    %232 = arith.divf %230, %231 : vector<16x128xf32>
    %233 = vector.extract_strided_slice %215 {offsets = [0, 256], sizes = [16, 128], strides = [1, 1]} : vector<16x384xf32> to vector<16x128xf32>
    %234 = vector.extract_strided_slice %216 {offsets = [0, 256], sizes = [16, 128], strides = [1, 1]} : vector<16x384xf32> to vector<16x128xf32>
    %235 = arith.addf %234, %5 : vector<16x128xf32>
    %236 = arith.mulf %224, %235 : vector<16x128xf32>
    %237 = arith.addf %233, %236 : vector<16x128xf32>
    %238 = math.tanh %237 : vector<16x128xf32>
    %cst_46 = arith.constant 1.000000e+00 : f32
    %239 = vector.broadcast %cst_46 : f32 to vector<16x128xf32>
    %240 = arith.subf %239, %232 : vector<16x128xf32>
    %241 = arith.mulf %240, %238 : vector<16x128xf32>
    %242 = arith.mulf %232, %210 : vector<16x128xf32>
    %243 = arith.addf %241, %242 : vector<16x128xf32>
    %244 = arith.mulf %243, %8 : vector<16x128xf32>
    %cst_47 = arith.constant dense<0.000000e+00> : vector<16xf32>
    %245 = vector.multi_reduction <add>, %244, %cst_47 [1] : vector<16x128xf32> to vector<16xf32>
    %246 = vector.shape_cast %245 : vector<16xf32> to vector<16x1xf32>
    %247 = vector.extract_strided_slice %14 {offsets = [7, 0, 0], sizes = [1, 16, 384], strides = [1, 1, 1]} : vector<8x16x384xf32> to vector<1x16x384xf32>
    %248 = vector.shape_cast %247 : vector<1x16x384xf32> to vector<16x384xf32>
    %cst_48 = arith.constant dense<0.000000e+00> : vector<16x384xf32>
    %249 = tpu.matmul %243, %1, %cst_48 {dimension_numbers = #tpu.dot_dimension_numbers<[1], [0], [0], [1], [0, 0, 1, 1], [], []>} : vector<16x128xf32>, vector<128x384xf32>, vector<16x384xf32> -> vector<16x384xf32>
    %250 = vector.extract_strided_slice %248 {offsets = [0, 0], sizes = [16, 128], strides = [1, 1]} : vector<16x384xf32> to vector<16x128xf32>
    %251 = vector.extract_strided_slice %249 {offsets = [0, 0], sizes = [16, 128], strides = [1, 1]} : vector<16x384xf32> to vector<16x128xf32>
    %252 = arith.addf %250, %251 : vector<16x128xf32>
    %253 = arith.negf %252 : vector<16x128xf32>
    %254 = math.exp %253 : vector<16x128xf32>
    %cst_49 = arith.constant 1.000000e+00 : f32
    %255 = vector.broadcast %cst_49 : f32 to vector<16x128xf32>
    %256 = arith.addf %255, %254 : vector<16x128xf32>
    %257 = arith.divf %255, %256 : vector<16x128xf32>
    %258 = vector.extract_strided_slice %248 {offsets = [0, 128], sizes = [16, 128], strides = [1, 1]} : vector<16x384xf32> to vector<16x128xf32>
    %259 = vector.extract_strided_slice %249 {offsets = [0, 128], sizes = [16, 128], strides = [1, 1]} : vector<16x384xf32> to vector<16x128xf32>
    %260 = arith.addf %258, %259 : vector<16x128xf32>
    %261 = arith.negf %260 : vector<16x128xf32>
    %262 = math.exp %261 : vector<16x128xf32>
    %cst_50 = arith.constant 1.000000e+00 : f32
    %263 = vector.broadcast %cst_50 : f32 to vector<16x128xf32>
    %264 = arith.addf %263, %262 : vector<16x128xf32>
    %265 = arith.divf %263, %264 : vector<16x128xf32>
    %266 = vector.extract_strided_slice %248 {offsets = [0, 256], sizes = [16, 128], strides = [1, 1]} : vector<16x384xf32> to vector<16x128xf32>
    %267 = vector.extract_strided_slice %249 {offsets = [0, 256], sizes = [16, 128], strides = [1, 1]} : vector<16x384xf32> to vector<16x128xf32>
    %268 = arith.addf %267, %5 : vector<16x128xf32>
    %269 = arith.mulf %257, %268 : vector<16x128xf32>
    %270 = arith.addf %266, %269 : vector<16x128xf32>
    %271 = math.tanh %270 : vector<16x128xf32>
    %cst_51 = arith.constant 1.000000e+00 : f32
    %272 = vector.broadcast %cst_51 : f32 to vector<16x128xf32>
    %273 = arith.subf %272, %265 : vector<16x128xf32>
    %274 = arith.mulf %273, %271 : vector<16x128xf32>
    %275 = arith.mulf %265, %243 : vector<16x128xf32>
    %276 = arith.addf %274, %275 : vector<16x128xf32>
    %277 = arith.mulf %276, %8 : vector<16x128xf32>
    %cst_52 = arith.constant dense<0.000000e+00> : vector<16xf32>
    %278 = vector.multi_reduction <add>, %277, %cst_52 [1] : vector<16x128xf32> to vector<16xf32>
    %279 = vector.shape_cast %278 : vector<16xf32> to vector<16x1xf32>
    %280 = tpu.concatenate %48, %81, %114, %147, %180, %213, %246, %279 in 1 : vector<16x1xf32>, vector<16x1xf32>, vector<16x1xf32>, vector<16x1xf32>, vector<16x1xf32>, vector<16x1xf32>, vector<16x1xf32>, vector<16x1xf32> -> vector<16x8xf32>
    %281 = tpu.transpose %280, [1, 0] : vector<16x8xf32> -> vector<8x16xf32>
    %c0_53 = arith.constant 0 : index
    %c0_54 = arith.constant 0 : index
    %282 = vector.load %arg1[%c0_53, %c0_54] : memref<8x16xi32, #tpu.memory_space<vmem>>, vector<8x16xi32>
    %c0_i32 = arith.constant 0 : i32
    %283 = vector.broadcast %c0_i32 : i32 to vector<8x16xi32>
    %284 = arith.cmpi sgt, %282, %283 : vector<8x16xi32>
    %cst_55 = arith.constant -9.000000e+15 : f32
    %285 = vector.broadcast %cst_55 : f32 to vector<8x16xf32>
    %286 = arith.select %284, %281, %285 : vector<8x16xi1>, vector<8x16xf32>
    %cst_56 = arith.constant dense<0xFF800000> : vector<16xf32>
    %287 = vector.multi_reduction <maximumf>, %286, %cst_56 [0] : vector<8x16xf32> to vector<16xf32>
    %288 = vector.shape_cast %287 : vector<16xf32> to vector<1x16xf32>
    %289 = vector.broadcast %288 : vector<1x16xf32> to vector<8x16xf32>
    %290 = arith.subf %286, %289 : vector<8x16xf32>
    %291 = math.exp %290 : vector<8x16xf32>
    %cst_57 = arith.constant dense<0.000000e+00> : vector<16xf32>
    %292 = vector.multi_reduction <add>, %291, %cst_57 [0] : vector<8x16xf32> to vector<16xf32>
    %293 = vector.shape_cast %292 : vector<16xf32> to vector<1x16xf32>
    %294 = tpu.reciprocal %293 {approx = true} : vector<1x16xf32> -> vector<1x16xf32>
    %295 = vector.broadcast %294 : vector<1x16xf32> to vector<8x16xf32>
    %296 = arith.mulf %291, %295 : vector<8x16xf32>
    %c0_58 = arith.constant 0 : index
    %c0_59 = arith.constant 0 : index
    %297 = vector.load %arg8[%c0_58, %c0_59] : memref<8x16xf32, #tpu.memory_space<vmem>>, vector<8x16xf32>
    tpu.vector_store %arg8[%c0_58, %c0_59], %296 {strides = array<i32>} : memref<8x16xf32, #tpu.memory_space<vmem>>, vector<8x16xf32>,
    return
  }
  func.func @transform_0(%arg0: i32) -> (i32, i32) {
    %c0_i32 = arith.constant 0 : i32
    %c0_i32_0 = arith.constant 0 : i32
    return %c0_i32, %arg0 : i32, i32
  }
  func.func @transform_1(%arg0: i32) -> (i32, i32, i32) {
    %c0_i32 = arith.constant 0 : i32
    %c0_i32_0 = arith.constant 0 : i32
    %c0_i32_1 = arith.constant 0 : i32
    return %c0_i32, %arg0, %c0_i32_0 : i32, i32, i32
  }
  func.func @transform_2(%arg0: i32) -> (i32, i32) {
    %c0_i32 = arith.constant 0 : i32
    %c0_i32_0 = arith.constant 0 : i32
    %c0_i32_1 = arith.constant 0 : i32
    return %c0_i32, %c0_i32_0 : i32, i32
  }
  func.func @transform_3(%arg0: i32) -> (i32, i32) {
    %c0_i32 = arith.constant 0 : i32
    %c0_i32_0 = arith.constant 0 : i32
    %c0_i32_1 = arith.constant 0 : i32
    return %c0_i32, %c0_i32_0 : i32, i32
  }
  func.func @transform_4(%arg0: i32) -> (i32, i32) {
    %c0_i32 = arith.constant 0 : i32
    %c0_i32_0 = arith.constant 0 : i32
    %c0_i32_1 = arith.constant 0 : i32
    return %c0_i32, %c0_i32_0 : i32, i32
  }
  func.func @transform_5(%arg0: i32) -> (i32, i32) {
    %c0_i32 = arith.constant 0 : i32
    %c0_i32_0 = arith.constant 0 : i32
    %c0_i32_1 = arith.constant 0 : i32
    return %c0_i32, %c0_i32_0 : i32, i32
  }
  func.func @transform_6(%arg0: i32) -> (i32, i32) {
    %c0_i32 = arith.constant 0 : i32
    %c0_i32_0 = arith.constant 0 : i32
    %c0_i32_1 = arith.constant 0 : i32
    return %c0_i32, %c0_i32_0 : i32, i32
  }
  func.func @transform_7(%arg0: i32) -> (i32, i32) {
    %c0_i32 = arith.constant 0 : i32
    %c0_i32_0 = arith.constant 0 : i32
    return %c0_i32, %arg0 : i32, i32
  }
}

</mosaic_0001>

<llo_original>
// kernel: tpu_custom_call.1
$region0: #{tpu_custom_call.1}
  #allocation0 [shape = 'u32[]', space=smem, size = 0x4, offset = 0x4, fixed_abs, tag = 'smem constant byte address 0x4 - core index']
  #allocation1 [shape = 'u32[144,128]{1,0:T(1,128)}', space=vmem, size = 0x12000, scoped, tag = 'internal scratch']
  %s0 = inlined_call_operand.hbm [shape: s32[8,16], index: 0, kind: input, shape index: {}]
  %s1 = inlined_call_operand.hbm [shape: bf16[8,16,128], index: 1, kind: input, shape index: {}]
  %s2 = inlined_call_operand.hbm [shape: bf16[128,384], index: 2, kind: input, shape index: {}]
  %s3 = inlined_call_operand.hbm [shape: f32[128,384], index: 3, kind: input, shape index: {}]
  %s4 = inlined_call_operand.vmem [shape: f32[1,384], index: 4, kind: input, shape index: {}]
  %s5 = inlined_call_operand.vmem [shape: f32[1,128], index: 5, kind: input, shape index: {}]
  %s6 = inlined_call_operand.vmem [shape: f32[1,128], index: 6, kind: input, shape index: {}]
  %s7 = inlined_call_operand.hbm [shape: f32[8,16], index: 7, kind: output, shape index: {}]
  %s8 = sld [smem:[#allocation0]]
  $region54: #{tpu_custom_call.1} parent=0
    _
  %s10 = ssub.s32 1, %s8
  %s11 = scalar_select 0, %s10, %s8
  $region1: #{tpu_custom_call.1} parent=0
    #allocation2 [shape = 'u8[4096]{0}', space=vmem, size = 0x1000, scoped, tag = 'input window, operand 0, single buffered']
    #allocation3 [shape = 's32[1]{0}', space=sflag, size = 0x4, scoped, tag = 'scoped memory for tpu_custom_call.1']
    #allocation4 [shape = 's32[1]{0}', space=sflag, size = 0x4, scoped, tag = 'scoped memory for tpu_custom_call.1']
    #allocation5 [shape = 'u8[32768]{0}', space=vmem, size = 0x8000, scoped, tag = 'input window, operand 1, single buffered']
    #allocation6 [shape = 's32[1]{0}', space=sflag, size = 0x4, scoped, tag = 'scoped memory for tpu_custom_call.1']
    #allocation7 [shape = 'u8[98304]{0}', space=vmem, size = 0x18000, scoped, tag = 'input window, operand 2, single buffered']
    #allocation8 [shape = 'u8[196608]{0}', space=vmem, size = 0x30000, scoped, tag = 'input window, operand 3, single buffered']
    #allocation9 [shape = 's32[1]{0}', space=sflag, size = 0x4, scoped, tag = 'scoped memory for tpu_custom_call.1']
    #allocation10 [shape = 'u8[4096]{0}', space=vmem, size = 0x1000, scoped, tag = 'output window, operand 0, single buffered']
    %12 = vsyncpa [#allocation3], 0
    %13 = vsyncpa [#allocation6], 0
    %14 = vsyncpa [#allocation9], 0
    %15 = vsyncpa [#allocation4], 0
    // Predicated region
    $region2: #{tpu_custom_call.1} parent=1 // pred_check
      _
    $region3: #{tpu_custom_call.1} parent=1 // pred_check_branch
      %17 = sbr.rel (0) target = $region5
    $region4: #{tpu_custom_call.1} parent=1 // pred_region
      %s19 = ssub.s32 128, 128
      %20 = vsyncadd [#allocation3], %s19
      %s22 = sshll.u32 [#allocation2], 4
      %s23 = int_to_ptr.vmem [resolvable:$true] %s22
      %25 = dma.hbm_to_vmem [thread:$0]  %s0, 128, %s23, [#allocation3]
    $region5: #{tpu_custom_call.1} parent=1 // pred_fallthru
      _
    // Predicated region
    $region6: #{tpu_custom_call.1} parent=1 // pred_check
      _
    $region7: #{tpu_custom_call.1} parent=1 // pred_check_branch
      %27 = sbr.rel (0) target = $region9
    $region8: #{tpu_custom_call.1} parent=1 // pred_region
      %s29 = ssub.s32 1024, 1024
      %30 = vsyncadd [#allocation6], %s29
      %s31 = sshll.u32 [#allocation5], 4
      %s32 = int_to_ptr.vmem [resolvable:$true] %s31
      %37 = dma.hbm_to_vmem [thread:$0]  %s1, 1024, %s32, [#allocation6], 64, 64, 4
    $region9: #{tpu_custom_call.1} parent=1 // pred_fallthru
      _
    // Predicated region
    $region10: #{tpu_custom_call.1} parent=1 // pred_check
      _
    $region11: #{tpu_custom_call.1} parent=1 // pred_check_branch
      %39 = sbr.rel (0) target = $region13
    $region12: #{tpu_custom_call.1} parent=1 // pred_region
      %s41 = ssub.s32 3072, 3072
      %42 = vsyncadd [#allocation6], %s41
      %s43 = sshll.u32 [#allocation7], 4
      %s44 = int_to_ptr.vmem [resolvable:$true] %s43
      %49 = dma.hbm_to_vmem [thread:$0]  %s2, 3072, %s44, [#allocation6], 192, 192, 12
    $region13: #{tpu_custom_call.1} parent=1 // pred_fallthru
      _
    // Predicated region
    $region14: #{tpu_custom_call.1} parent=1 // pred_check
      _
    $region15: #{tpu_custom_call.1} parent=1 // pred_check_branch
      %51 = sbr.rel (0) target = $region17
    $region16: #{tpu_custom_call.1} parent=1 // pred_region
      %s53 = ssub.s32 6144, 6144
      %54 = vsyncadd [#allocation9], %s53
      %s55 = sshll.u32 [#allocation8], 4
      %s56 = int_to_ptr.vmem [resolvable:$true] %s55
      %61 = dma.hbm_to_vmem [thread:$0]  %s3, 6144, %s56, [#allocation9], 384, 384, 24
    $region17: #{tpu_custom_call.1} parent=1 // pred_fallthru
      _
    // Predicated region
    $region18: #{tpu_custom_call.1} parent=1 // pred_check
      _
    $region19: #{tpu_custom_call.1} parent=1 // pred_check_branch
      %63 = sbr.rel (0) target = $region21
    $region20: #{tpu_custom_call.1} parent=1 // pred_region
      _
    $region21: #{tpu_custom_call.1} parent=1 // pred_fallthru
      _
    // Predicated region
    $region22: #{tpu_custom_call.1} parent=1 // pred_check
      _
    $region23: #{tpu_custom_call.1} parent=1 // pred_check_branch
      %65 = sbr.rel (0) target = $region25
    $region24: #{tpu_custom_call.1} parent=1 // pred_region
      _
    $region25: #{tpu_custom_call.1} parent=1 // pred_fallthru
      _
    // Predicated region
    $region26: #{tpu_custom_call.1} parent=1 // pred_check
      _
    $region27: #{tpu_custom_call.1} parent=1 // pred_check_branch
      %67 = sbr.rel (0) target = $region29
    $region28: #{tpu_custom_call.1} parent=1 // pred_region
      _
    $region29: #{tpu_custom_call.1} parent=1 // pred_fallthru
      _
    // Predicated region
    $region30: #{tpu_custom_call.1} parent=1 // pred_check
      _
    $region31: #{tpu_custom_call.1} parent=1 // pred_check_branch
      %69 = sbr.rel (0) target = $region33
    $region32: #{tpu_custom_call.1} parent=1 // pred_region
      %70 = dma.done [#allocation3], 128
    $region33: #{tpu_custom_call.1} parent=1 // pred_fallthru
      _
    // Predicated region
    $region34: #{tpu_custom_call.1} parent=1 // pred_check
      _
    $region35: #{tpu_custom_call.1} parent=1 // pred_check_branch
      %72 = sbr.rel (0) target = $region37
    $region36: #{tpu_custom_call.1} parent=1 // pred_region
      %73 = dma.done [#allocation6], 1024
    $region37: #{tpu_custom_call.1} parent=1 // pred_fallthru
      _
    // Predicated region
    $region38: #{tpu_custom_call.1} parent=1 // pred_check
      _
    $region39: #{tpu_custom_call.1} parent=1 // pred_check_branch
      %75 = sbr.rel (0) target = $region41
    $region40: #{tpu_custom_call.1} parent=1 // pred_region
      %76 = dma.done [#allocation6], 3072
    $region41: #{tpu_custom_call.1} parent=1 // pred_fallthru
      _
    // Predicated region
    $region42: #{tpu_custom_call.1} parent=1 // pred_check
      _
    $region43: #{tpu_custom_call.1} parent=1 // pred_check_branch
      %78 = sbr.rel (0) target = $region45
    $region44: #{tpu_custom_call.1} parent=1 // pred_region
      %79 = dma.done [#allocation9], 6144
    $region45: #{tpu_custom_call.1} parent=1 // pred_fallthru
      _
    %v81 = vld [vmem:[#allocation7] sm:$0xff]
    %v82 = vld [vmem:[#allocation7 + $0x8] sm:$0xf]
    %v83 = vld [vmem:[#allocation7 + $0xc] sm:$0xff]
    %v84 = vld [vmem:[#allocation7 + $0x14] sm:$0xf]
    %v85 = vld [vmem:[#allocation7 + $0x18] sm:$0xff]
    %v86 = vld [vmem:[#allocation7 + $0x20] sm:$0xf]
    %v87 = vld [vmem:[#allocation7 + $0x24] sm:$0xff]
    %v88 = vld [vmem:[#allocation7 + $0x2c] sm:$0xf]
    %v89 = vld [vmem:[#allocation7 + $0x30] sm:$0xff]
    %v90 = vld [vmem:[#allocation7 + $0x38] sm:$0xf]
    %v91 = vld [vmem:[#allocation7 + $0x3c] sm:$0xff]
    %v92 = vld [vmem:[#allocation7 + $0x44] sm:$0xf]
    %v93 = vld [vmem:[#allocation7 + $0x48] sm:$0xff]
    %v94 = vld [vmem:[#allocation7 + $0x50] sm:$0xf]
    %v95 = vld [vmem:[#allocation7 + $0x54] sm:$0xff]
    %v96 = vld [vmem:[#allocation7 + $0x5c] sm:$0xf]
    %v97 = vld [vmem:[#allocation7 + $0x60] sm:$0xff]
    %v98 = vld [vmem:[#allocation7 + $0x68] sm:$0xf]
    %v99 = vld [vmem:[#allocation7 + $0x6c] sm:$0xff]
    %v100 = vld [vmem:[#allocation7 + $0x74] sm:$0xf]
    %v101 = vld [vmem:[#allocation7 + $0x78] sm:$0xff]
    %v102 = vld [vmem:[#allocation7 + $0x80] sm:$0xf]
    %v103 = vld [vmem:[#allocation7 + $0x84] sm:$0xff]
    %v104 = vld [vmem:[#allocation7 + $0x8c] sm:$0xf]
    %v105 = vld [vmem:[#allocation7 + $0x90] sm:$0xff]
    %v106 = vld [vmem:[#allocation7 + $0x98] sm:$0xf]
    %v107 = vld [vmem:[#allocation7 + $0x9c] sm:$0xff]
    %v108 = vld [vmem:[#allocation7 + $0xa4] sm:$0xf]
    %v109 = vld [vmem:[#allocation7 + $0xa8] sm:$0xff]
    %v110 = vld [vmem:[#allocation7 + $0xb0] sm:$0xf]
    %v111 = vld [vmem:[#allocation7 + $0xb4] sm:$0xff]
    %v112 = vld [vmem:[#allocation7 + $0xbc] sm:$0xf]
    %v113 = vld [vmem:[#allocation8] sm:$0xff]
    %v114 = vld [vmem:[#allocation8 + $0x8] sm:$0xff]
    %v115 = vld [vmem:[#allocation8 + $0x10] sm:$0xff]
    %v116 = vld [vmem:[#allocation8 + $0x18] sm:$0xff]
    %v117 = vld [vmem:[#allocation8 + $0x20] sm:$0xff]
    %v118 = vld [vmem:[#allocation8 + $0x28] sm:$0xff]
    %v119 = vld [vmem:[#allocation8 + $0x30] sm:$0xff]
    %v120 = vld [vmem:[#allocation8 + $0x38] sm:$0xff]
    %v121 = vld [vmem:[#allocation8 + $0x40] sm:$0xff]
    %v122 = vld [vmem:[#allocation8 + $0x48] sm:$0xff]
    %v123 = vld [vmem:[#allocation8 + $0x50] sm:$0xff]
    %v124 = vld [vmem:[#allocation8 + $0x58] sm:$0xff]
    %v125 = vld [vmem:[#allocation8 + $0x60] sm:$0xff]
    %v126 = vld [vmem:[#allocation8 + $0x68] sm:$0xff]
    %v127 = vld [vmem:[#allocation8 + $0x70] sm:$0xff]
    %v128 = vld [vmem:[#allocation8 + $0x78] sm:$0xff]
    %v129 = vld [vmem:[#allocation8 + $0x80] sm:$0xff]
    %v130 = vld [vmem:[#allocation8 + $0x88] sm:$0xff]
    %v131 = vld [vmem:[#allocation8 + $0x90] sm:$0xff]
    %v132 = vld [vmem:[#allocation8 + $0x98] sm:$0xff]
    %v133 = vld [vmem:[#allocation8 + $0xa0] sm:$0xff]
    %v134 = vld [vmem:[#allocation8 + $0xa8] sm:$0xff]
    %v135 = vld [vmem:[#allocation8 + $0xb0] sm:$0xff]
    %v136 = vld [vmem:[#allocation8 + $0xb8] sm:$0xff]
    %v137 = vld [vmem:[#allocation8 + $0xc0] sm:$0xff]
    %v138 = vld [vmem:[#allocation8 + $0xc8] sm:$0xff]
    %v139 = vld [vmem:[#allocation8 + $0xd0] sm:$0xff]
    %v140 = vld [vmem:[#allocation8 + $0xd8] sm:$0xff]
    %v141 = vld [vmem:[#allocation8 + $0xe0] sm:$0xff]
    %v142 = vld [vmem:[#allocation8 + $0xe8] sm:$0xff]
    %v143 = vld [vmem:[#allocation8 + $0xf0] sm:$0xff]
    %v144 = vld [vmem:[#allocation8 + $0xf8] sm:$0xff]
    %v145 = vld [vmem:[#allocation8 + $0x100] sm:$0xff]
    %v146 = vld [vmem:[#allocation8 + $0x108] sm:$0xff]
    %v147 = vld [vmem:[#allocation8 + $0x110] sm:$0xff]
    %v148 = vld [vmem:[#allocation8 + $0x118] sm:$0xff]
    %v149 = vld [vmem:[#allocation8 + $0x120] sm:$0xff]
    %v150 = vld [vmem:[#allocation8 + $0x128] sm:$0xff]
    %v151 = vld [vmem:[#allocation8 + $0x130] sm:$0xff]
    %v152 = vld [vmem:[#allocation8 + $0x138] sm:$0xff]
    %v153 = vld [vmem:[#allocation8 + $0x140] sm:$0xff]
    %v154 = vld [vmem:[#allocation8 + $0x148] sm:$0xff]
    %v155 = vld [vmem:[#allocation8 + $0x150] sm:$0xff]
    %v156 = vld [vmem:[#allocation8 + $0x158] sm:$0xff]
    %v157 = vld [vmem:[#allocation8 + $0x160] sm:$0xff]
    %v158 = vld [vmem:[#allocation8 + $0x168] sm:$0xff]
    %v159 = vld [vmem:[#allocation8 + $0x170] sm:$0xff]
    %v160 = vld [vmem:[#allocation8 + $0x178] sm:$0xff]
    %v161 = vld [vmem:[%s4] sm:$0x7]
    %v162 = vld [vmem:[%s5] sm:$0x1]
    %v164 = vlaneseq
    %v165 = vshrl.u32 %v164, 7
    %v166 = vsub.s32 0, %v165
    %v167 = vrot.slane %v162, %v166
    %v169 = vld [vmem:[%s6] sm:$0x1]
    %v171 = vlaneseq
    %v172 = vshrl.u32 %v171, 7
    %v173 = vsub.s32 0, %v172
    %v174 = vrot.slane %v169, %v173
    %v176 = vld [vmem:[#allocation5] sm:$0xf]
    %v177 = vld [vmem:[#allocation5 + $0x4] sm:$0xf]
    %v178 = vld [vmem:[#allocation5 + $0x8] sm:$0xf]
    %v179 = vld [vmem:[#allocation5 + $0xc] sm:$0xf]
    %v180 = vld [vmem:[#allocation5 + $0x10] sm:$0xf]
    %v181 = vld [vmem:[#allocation5 + $0x14] sm:$0xf]
    %v182 = vld [vmem:[#allocation5 + $0x18] sm:$0xf]
    %v183 = vld [vmem:[#allocation5 + $0x1c] sm:$0xf]
    %v184 = vld [vmem:[#allocation5 + $0x20] sm:$0xf]
    %v185 = vld [vmem:[#allocation5 + $0x24] sm:$0xf]
    %v186 = vld [vmem:[#allocation5 + $0x28] sm:$0xf]
    %v187 = vld [vmem:[#allocation5 + $0x2c] sm:$0xf]
    %v188 = vld [vmem:[#allocation5 + $0x30] sm:$0xf]
    %v189 = vld [vmem:[#allocation5 + $0x34] sm:$0xf]
    %v190 = vld [vmem:[#allocation5 + $0x38] sm:$0xf]
    %v191 = vld [vmem:[#allocation5 + $0x3c] sm:$0xf]
    %v193 = vlaneseq
    %v194 = vshrl.u32 %v193, 7
    %v195 = vsub.s32 0, %v194
    %v196 = vrot.slane %v161, %v195
    %v197 = vlaneseq
    %v198 = vshrl.u32 %v197, 7
    %v199 = vsub.s32 1, %v198
    %v200 = vrot.slane %v161, %v199
    %v201 = vlaneseq
    %v202 = vshrl.u32 %v201, 7
    %v203 = vsub.s32 2, %v202
    %v204 = vrot.slane %v161, %v203
    %v224 = vunpack.c.l.b16 %v176
    %v225 = vunpack.c.l.b16 %v177
    %v226 = vunpack.c.l.b16 %v178
    %v227 = vunpack.c.l.b16 %v179
    %v228 = vunpack.c.l.b16 %v180
    %v229 = vunpack.c.l.b16 %v181
    %v230 = vunpack.c.l.b16 %v182
    %v231 = vunpack.c.l.b16 %v183
    %v232 = vunpack.c.l.b16 %v184
    %v233 = vunpack.c.l.b16 %v185
    %v234 = vunpack.c.l.b16 %v186
    %v235 = vunpack.c.l.b16 %v187
    %v236 = vunpack.c.l.b16 %v188
    %v237 = vunpack.c.l.b16 %v189
    %v238 = vunpack.c.l.b16 %v190
    %v239 = vunpack.c.l.b16 %v191
    %v240 = vpack.c.b16 %v225, %v224
    %v241 = vpack.c.b16 %v227, %v226
    %v242 = vpack.c.b16 %v229, %v228
    %v243 = vpack.c.b16 %v231, %v230
    %v244 = vpack.c.b16 %v233, %v232
    %v245 = vpack.c.b16 %v235, %v234
    %v246 = vpack.c.b16 %v237, %v236
    %v247 = vpack.c.b16 %v239, %v238
    %v288 = vunpack.c.l.b16 %v81
    %v289 = vunpack.c.h.b16 %v81
    %v290 = vunpack.c.l.b16 %v82
    %v291 = vunpack.c.l.b16 %v83
    %v292 = vunpack.c.h.b16 %v83
    %v293 = vunpack.c.l.b16 %v84
    %v294 = vunpack.c.l.b16 %v85
    %v295 = vunpack.c.h.b16 %v85
    %v296 = vunpack.c.l.b16 %v86
    %v297 = vunpack.c.l.b16 %v87
    %v298 = vunpack.c.h.b16 %v87
    %v299 = vunpack.c.l.b16 %v88
    %v300 = vunpack.c.l.b16 %v89
    %v301 = vunpack.c.h.b16 %v89
    %v302 = vunpack.c.l.b16 %v90
    %v303 = vunpack.c.l.b16 %v91
    %v304 = vunpack.c.h.b16 %v91
    %v305 = vunpack.c.l.b16 %v92
    %v306 = vunpack.c.l.b16 %v93
    %v307 = vunpack.c.h.b16 %v93
    %v308 = vunpack.c.l.b16 %v94
    %v309 = vunpack.c.l.b16 %v95
    %v310 = vunpack.c.h.b16 %v95
    %v311 = vunpack.c.l.b16 %v96
    %v312 = vunpack.c.l.b16 %v97
    %v313 = vunpack.c.h.b16 %v97
    %v314 = vunpack.c.l.b16 %v98
    %v315 = vunpack.c.l.b16 %v99
    %v316 = vunpack.c.h.b16 %v99
    %v317 = vunpack.c.l.b16 %v100
    %v318 = vunpack.c.l.b16 %v101
    %v319 = vunpack.c.h.b16 %v101
    %v320 = vunpack.c.l.b16 %v102
    %v321 = vunpack.c.l.b16 %v103
    %v322 = vunpack.c.h.b16 %v103
    %v323 = vunpack.c.l.b16 %v104
    %v324 = vunpack.c.l.b16 %v105
    %v325 = vunpack.c.h.b16 %v105
    %v326 = vunpack.c.l.b16 %v106
    %v327 = vunpack.c.l.b16 %v107
    %v328 = vunpack.c.h.b16 %v107
    %v329 = vunpack.c.l.b16 %v108
    %v330 = vunpack.c.l.b16 %v109
    %v331 = vunpack.c.h.b16 %v109
    %v332 = vunpack.c.l.b16 %v110
    %v333 = vunpack.c.l.b16 %v111
    %v334 = vunpack.c.h.b16 %v111
    %v335 = vunpack.c.l.b16 %v112
    %v336 = vpack.c.b16 %v291, %v288
    %v337 = vpack.c.b16 %v292, %v289
    %v338 = vpack.c.b16 %v293, %v290
    %v339 = vpack.c.b16 %v297, %v294
    %v340 = vpack.c.b16 %v298, %v295
    %v341 = vpack.c.b16 %v299, %v296
    %v342 = vpack.c.b16 %v303, %v300
    %v343 = vpack.c.b16 %v304, %v301
    %v344 = vpack.c.b16 %v305, %v302
    %v345 = vpack.c.b16 %v309, %v306
    %v346 = vpack.c.b16 %v310, %v307
    %v347 = vpack.c.b16 %v311, %v308
    %v348 = vpack.c.b16 %v315, %v312
    %v349 = vpack.c.b16 %v316, %v313
    %v350 = vpack.c.b16 %v317, %v314
    %v351 = vpack.c.b16 %v321, %v318
    %v352 = vpack.c.b16 %v322, %v319
    %v353 = vpack.c.b16 %v323, %v320
    %v354 = vpack.c.b16 %v327, %v324
    %v355 = vpack.c.b16 %v328, %v325
    %v356 = vpack.c.b16 %v329, %v326
    %v357 = vpack.c.b16 %v333, %v330
    %v358 = vpack.c.b16 %v334, %v331
    %v359 = vpack.c.b16 %v335, %v332
    %384 = vmatprep.subr.bf16.mxu0 %v358
    %385 = vmatpush1.bf16.msra.mxu0 %v357
    %386 = vmatprep.subr.bf16.mxu0 %v355
    %387 = vmatpush1.bf16.msra.mxu0 %v354
    %388 = vmatprep.subr.bf16.mxu0 %v352
    %389 = vmatpush1.bf16.msra.mxu0 %v351
    %390 = vmatprep.subr.bf16.mxu0 %v349
    %391 = vmatpush1.bf16.msra.mxu0 %v348
    %392 = vmatprep.subr.bf16.mxu0 %v346
    %393 = vmatpush1.bf16.msra.mxu0 %v345
    %394 = vmatprep.subr.bf16.mxu0 %v343
    %395 = vmatpush1.bf16.msra.mxu0 %v342
    %396 = vmatprep.subr.bf16.mxu0 %v340
    %397 = vmatpush1.bf16.msra.mxu0 %v339
    %398 = vmatprep.subr.bf16.mxu0 %v337
    %399 = vmatpush1.bf16.msra.mxu0 %v336
    %400 = vmatprep.subr.bf16.mxu0 0
    %401 = vmatpush2.bf16.msra.mxu0 0
    %402 = vmatprep.subr.bf16.mxu0 0
    %403 = vmatpush2.bf16.msra.mxu0 0
    %404 = vmatprep.subr.bf16.mxu0 0
    %405 = vmatpush2.bf16.msra.mxu0 0
    %406 = vmatprep.subr.bf16.mxu0 0
    %407 = vmatpush2.bf16.msra.mxu0 0
    %408 = vmatprep.subr.bf16.mxu0 0
    %409 = vmatpush2.bf16.msra.mxu0 0
    %410 = vmatprep.subr.bf16.mxu0 0
    %411 = vmatpush2.bf16.msra.mxu0 0
    %412 = vmatprep.subr.bf16.mxu0 0
    %413 = vmatpush2.bf16.msra.mxu0 0
    %414 = vmatprep.subr.bf16.mxu0 0
    %415 = vmatpush2.bf16.msra.mxu0 0
    %416 = vmatprep.mubr.bf16.mxu0 0
    %417 = vmatmul.mubr.bf16.gmra.mxu0 %v240
    %v418 = vpop.f32.mrf.mxu0
    %v419 = vadd.f32 %v196, %v418
    %v420 = vpop.f32.mrf.mxu0
    %v421 = vadd.f32 %v200, %v420
    %v422 = vpop.f32.mrf.mxu0
    %v423 = vadd.f32 %v196, %v422
    %v424 = vpop.f32.mrf.mxu0
    %v425 = vadd.f32 %v200, %v424
    %426 = vmatprep.mubr.bf16.mxu0 0
    %427 = vmatmul.mubr.bf16.gmra.mxu0 %v241
    %v428 = vpop.f32.mrf.mxu0
    %v429 = vadd.f32 %v196, %v428
    %v430 = vpop.f32.mrf.mxu0
    %v431 = vadd.f32 %v200, %v430
    %v432 = vpop.f32.mrf.mxu0
    %v433 = vadd.f32 %v196, %v432
    %v434 = vpop.f32.mrf.mxu0
    %v435 = vadd.f32 %v200, %v434
    %436 = vmatprep.mubr.bf16.mxu0 0
    %437 = vmatmul.mubr.bf16.gmra.mxu0 %v242
    %v438 = vpop.f32.mrf.mxu0
    %v439 = vadd.f32 %v196, %v438
    %v440 = vpop.f32.mrf.mxu0
    %v441 = vadd.f32 %v200, %v440
    %v442 = vpop.f32.mrf.mxu0
    %v443 = vadd.f32 %v196, %v442
    %v444 = vpop.f32.mrf.mxu0
    %v445 = vadd.f32 %v200, %v444
    %446 = vmatprep.mubr.bf16.mxu0 0
    %447 = vmatmul.mubr.bf16.gmra.mxu0 %v243
    %v448 = vpop.f32.mrf.mxu0
    %v449 = vadd.f32 %v196, %v448
    %v450 = vpop.f32.mrf.mxu0
    %v451 = vadd.f32 %v200, %v450
    %v452 = vpop.f32.mrf.mxu0
    %v453 = vadd.f32 %v196, %v452
    %v454 = vpop.f32.mrf.mxu0
    %v455 = vadd.f32 %v200, %v454
    %456 = vmatprep.mubr.bf16.mxu0 0
    %457 = vmatmul.mubr.bf16.gmra.mxu0 %v244
    %v458 = vpop.f32.mrf.mxu0
    %v459 = vadd.f32 %v196, %v458
    %v460 = vpop.f32.mrf.mxu0
    %v461 = vadd.f32 %v200, %v460
    %v462 = vpop.f32.mrf.mxu0
    %v463 = vadd.f32 %v196, %v462
    %v464 = vpop.f32.mrf.mxu0
    %v465 = vadd.f32 %v200, %v464
    %466 = vmatprep.mubr.bf16.mxu0 0
    %467 = vmatmul.mubr.bf16.gmra.mxu0 %v245
    %v468 = vpop.f32.mrf.mxu0
    %v469 = vadd.f32 %v196, %v468
    %v470 = vpop.f32.mrf.mxu0
    %v471 = vadd.f32 %v200, %v470
    %v472 = vpop.f32.mrf.mxu0
    %v473 = vadd.f32 %v196, %v472
    %v474 = vpop.f32.mrf.mxu0
    %v475 = vadd.f32 %v200, %v474
    %476 = vmatprep.mubr.bf16.mxu0 0
    %477 = vmatmul.mubr.bf16.gmra.mxu0 %v246
    %v478 = vpop.f32.mrf.mxu0
    %v479 = vadd.f32 %v196, %v478
    %v480 = vpop.f32.mrf.mxu0
    %v481 = vadd.f32 %v200, %v480
    %v482 = vpop.f32.mrf.mxu0
    %v483 = vadd.f32 %v196, %v482
    %v484 = vpop.f32.mrf.mxu0
    %v485 = vadd.f32 %v200, %v484
    %486 = vmatprep.mubr.bf16.mxu0 0
    %487 = vmatmul.mubr.bf16.gmra.mxu0 %v247
    %v488 = vpop.f32.mrf.mxu0
    %v489 = vadd.f32 %v196, %v488
    %v490 = vpop.f32.mrf.mxu0
    %v491 = vadd.f32 %v200, %v490
    %v492 = vpop.f32.mrf.mxu0
    %v493 = vadd.f32 %v196, %v492
    %v494 = vpop.f32.mrf.mxu0
    %v495 = vadd.f32 %v200, %v494
    %496 = vdwg.mxu0
    %497 = vmatprep.subr.bf16.mxu0 0
    %498 = vmatpush1.bf16.msra.mxu0 %v359
    %499 = vmatprep.subr.bf16.mxu0 0
    %500 = vmatpush1.bf16.msra.mxu0 %v356
    %501 = vmatprep.subr.bf16.mxu0 0
    %502 = vmatpush1.bf16.msra.mxu0 %v353
    %503 = vmatprep.subr.bf16.mxu0 0
    %504 = vmatpush1.bf16.msra.mxu0 %v350
    %505 = vmatprep.subr.bf16.mxu0 0
    %506 = vmatpush1.bf16.msra.mxu0 %v347
    %507 = vmatprep.subr.bf16.mxu0 0
    %508 = vmatpush1.bf16.msra.mxu0 %v344
    %509 = vmatprep.subr.bf16.mxu0 0
    %510 = vmatpush1.bf16.msra.mxu0 %v341
    %511 = vmatprep.subr.bf16.mxu0 0
    %512 = vmatpush1.bf16.msra.mxu0 %v338
    %513 = vmatprep.subr.bf16.mxu0 0
    %514 = vmatpush2.bf16.msra.mxu0 0
    %515 = vmatprep.subr.bf16.mxu0 0
    %516 = vmatpush2.bf16.msra.mxu0 0
    %517 = vmatprep.subr.bf16.mxu0 0
    %518 = vmatpush2.bf16.msra.mxu0 0
    %519 = vmatprep.subr.bf16.mxu0 0
    %520 = vmatpush2.bf16.msra.mxu0 0
    %521 = vmatprep.subr.bf16.mxu0 0
    %522 = vmatpush2.bf16.msra.mxu0 0
    %523 = vmatprep.subr.bf16.mxu0 0
    %524 = vmatpush2.bf16.msra.mxu0 0
    %525 = vmatprep.subr.bf16.mxu0 0
    %526 = vmatpush2.bf16.msra.mxu0 0
    %527 = vmatprep.subr.bf16.mxu0 0
    %528 = vmatpush2.bf16.msra.mxu0 0
    %529 = vmatprep.mubr.bf16.mxu0 0
    %530 = vmatmul.mubr.bf16.gmra.mxu0 %v240
    %v531 = vpop.f32.mrf.mxu0
    %v532 = vadd.f32 %v204, %v531
    %v533 = vpop.f32.mrf.mxu0
    %v534 = vpop.f32.mrf.mxu0
    %v535 = vadd.f32 %v204, %v534
    %v536 = vpop.f32.mrf.mxu0
    %537 = vmatprep.mubr.bf16.mxu0 0
    %538 = vmatmul.mubr.bf16.gmra.mxu0 %v241
    %v539 = vpop.f32.mrf.mxu0
    %v540 = vadd.f32 %v204, %v539
    %v541 = vpop.f32.mrf.mxu0
    %v542 = vpop.f32.mrf.mxu0
    %v543 = vadd.f32 %v204, %v542
    %v544 = vpop.f32.mrf.mxu0
    %545 = vmatprep.mubr.bf16.mxu0 0
    %546 = vmatmul.mubr.bf16.gmra.mxu0 %v242
    %v547 = vpop.f32.mrf.mxu0
    %v548 = vadd.f32 %v204, %v547
    %v549 = vpop.f32.mrf.mxu0
    %v550 = vpop.f32.mrf.mxu0
    %v551 = vadd.f32 %v204, %v550
    %v552 = vpop.f32.mrf.mxu0
    %553 = vmatprep.mubr.bf16.mxu0 0
    %554 = vmatmul.mubr.bf16.gmra.mxu0 %v243
    %v555 = vpop.f32.mrf.mxu0
    %v556 = vadd.f32 %v204, %v555
    %v557 = vpop.f32.mrf.mxu0
    %v558 = vpop.f32.mrf.mxu0
    %v559 = vadd.f32 %v204, %v558
    %v560 = vpop.f32.mrf.mxu0
    %561 = vmatprep.mubr.bf16.mxu0 0
    %562 = vmatmul.mubr.bf16.gmra.mxu0 %v244
    %v563 = vpop.f32.mrf.mxu0
    %v564 = vadd.f32 %v204, %v563
    %v565 = vpop.f32.mrf.mxu0
    %v566 = vpop.f32.mrf.mxu0
    %v567 = vadd.f32 %v204, %v566
    %v568 = vpop.f32.mrf.mxu0
    %569 = vmatprep.mubr.bf16.mxu0 0
    %570 = vmatmul.mubr.bf16.gmra.mxu0 %v245
    %v571 = vpop.f32.mrf.mxu0
    %v572 = vadd.f32 %v204, %v571
    %v573 = vpop.f32.mrf.mxu0
    %v574 = vpop.f32.mrf.mxu0
    %v575 = vadd.f32 %v204, %v574
    %v576 = vpop.f32.mrf.mxu0
    %577 = vmatprep.mubr.bf16.mxu0 0
    %578 = vmatmul.mubr.bf16.gmra.mxu0 %v246
    %v579 = vpop.f32.mrf.mxu0
    %v580 = vadd.f32 %v204, %v579
    %v581 = vpop.f32.mrf.mxu0
    %v582 = vpop.f32.mrf.mxu0
    %v583 = vadd.f32 %v204, %v582
    %v584 = vpop.f32.mrf.mxu0
    %585 = vmatprep.mubr.bf16.mxu0 0
    %586 = vmatmul.mubr.bf16.gmra.mxu0 %v247
    %v587 = vpop.f32.mrf.mxu0
    %v588 = vadd.f32 %v204, %v587
    %v589 = vpop.f32.mrf.mxu0
    %v590 = vpop.f32.mrf.mxu0
    %v591 = vadd.f32 %v204, %v590
    %v592 = vpop.f32.mrf.mxu0
    %593 = vdwg.mxu0
    %594 = vmatprep.subr.mxu0 %v159
    %595 = vmatpush1.msra.mxu0 %v158
    %596 = vmatprep.subr.mxu0 %v156
    %597 = vmatpush1.msra.mxu0 %v155
    %598 = vmatprep.subr.mxu0 %v153
    %599 = vmatpush1.msra.mxu0 %v152
    %600 = vmatprep.subr.mxu0 %v150
    %601 = vmatpush1.msra.mxu0 %v149
    %602 = vmatprep.subr.mxu0 %v147
    %603 = vmatpush1.msra.mxu0 %v146
    %604 = vmatprep.subr.mxu0 %v144
    %605 = vmatpush1.msra.mxu0 %v143
    %606 = vmatprep.subr.mxu0 %v141
    %607 = vmatpush1.msra.mxu0 %v140
    %608 = vmatprep.subr.mxu0 %v138
    %609 = vmatpush1.msra.mxu0 %v137
    %610 = vmatprep.subr.mxu0 %v135
    %611 = vmatpush1.msra.mxu0 %v134
    %612 = vmatprep.subr.mxu0 %v132
    %613 = vmatpush1.msra.mxu0 %v131
    %614 = vmatprep.subr.mxu0 %v129
    %615 = vmatpush1.msra.mxu0 %v128
    %616 = vmatprep.subr.mxu0 %v126
    %617 = vmatpush1.msra.mxu0 %v125
    %618 = vmatprep.subr.mxu0 %v123
    %619 = vmatpush1.msra.mxu0 %v122
    %620 = vmatprep.subr.mxu0 %v120
    %621 = vmatpush1.msra.mxu0 %v119
    %622 = vmatprep.subr.mxu0 %v117
    %623 = vmatpush1.msra.mxu0 %v116
    %624 = vmatprep.subr.mxu0 %v114
    %625 = vmatpush1.msra.mxu0 %v113
    %626 = vmatprep.subr.mxu0 0.0
    %627 = vmatpush2.msra.mxu0 0.0
    %628 = vmatprep.subr.mxu0 0.0
    %629 = vmatpush2.msra.mxu0 0.0
    %630 = vmatprep.subr.mxu0 0.0
    %631 = vmatpush2.msra.mxu0 0.0
    %632 = vmatprep.subr.mxu0 0.0
    %633 = vmatpush2.msra.mxu0 0.0
    %634 = vmatprep.subr.mxu0 0.0
    %635 = vmatpush2.msra.mxu0 0.0
    %636 = vmatprep.subr.mxu0 0.0
    %637 = vmatpush2.msra.mxu0 0.0
    %638 = vmatprep.subr.mxu0 0.0
    %639 = vmatpush2.msra.mxu0 0.0
    %640 = vmatprep.subr.mxu0 0.0
    %641 = vmatpush2.msra.mxu0 0.0
    %642 = vmatprep.subr.mxu0 0.0
    %643 = vmatpush2.msra.mxu0 0.0
    %644 = vmatprep.subr.mxu0 0.0
    %645 = vmatpush2.msra.mxu0 0.0
    %646 = vmatprep.subr.mxu0 0.0
    %647 = vmatpush2.msra.mxu0 0.0
    %648 = vmatprep.subr.mxu0 0.0
    %649 = vmatpush2.msra.mxu0 0.0
    %650 = vmatprep.subr.mxu0 0.0
    %651 = vmatpush2.msra.mxu0 0.0
    %652 = vmatprep.subr.mxu0 0.0
    %653 = vmatpush2.msra.mxu0 0.0
    %654 = vmatprep.subr.mxu0 0.0
    %655 = vmatpush2.msra.mxu0 0.0
    %656 = vmatprep.subr.mxu0 0.0
    %657 = vmatpush2.msra.mxu0 0.0
    %658 = vmatprep.mubr.f32.mxu0 0.0
    %659 = vmatmul.mubr.f32.gmra.mxu0 0.0
    %v660 = vpop.f32.mrf.mxu0
    %v661 = vadd.f32 0.0, %v660
    %v662 = vpop.f32.mrf.mxu0
    %v663 = vadd.f32 0.0, %v662
    %664 = vmatprep.mubr.f32.mxu0 0.0
    %665 = vmatmul.mubr.f32.gmra.mxu0 0.0
    %v666 = vpop.f32.mrf.mxu0
    %v667 = vadd.f32 0.0, %v666
    %v668 = vpop.f32.mrf.mxu0
    %v669 = vadd.f32 0.0, %v668
    %670 = vdwg.mxu0
    %671 = vmatprep.subr.mxu0 0.0
    %672 = vmatpush1.msra.mxu0 %v160
    %673 = vmatprep.subr.mxu0 0.0
    %674 = vmatpush1.msra.mxu0 %v157
    %675 = vmatprep.subr.mxu0 0.0
    %676 = vmatpush1.msra.mxu0 %v154
    %677 = vmatprep.subr.mxu0 0.0
    %678 = vmatpush1.msra.mxu0 %v151
    %679 = vmatprep.subr.mxu0 0.0
    %680 = vmatpush1.msra.mxu0 %v148
    %681 = vmatprep.subr.mxu0 0.0
    %682 = vmatpush1.msra.mxu0 %v145
    %683 = vmatprep.subr.mxu0 0.0
    %684 = vmatpush1.msra.mxu0 %v142
    %685 = vmatprep.subr.mxu0 0.0
    %686 = vmatpush1.msra.mxu0 %v139
    %687 = vmatprep.subr.mxu0 0.0
    %688 = vmatpush1.msra.mxu0 %v136
    %689 = vmatprep.subr.mxu0 0.0
    %690 = vmatpush1.msra.mxu0 %v133
    %691 = vmatprep.subr.mxu0 0.0
    %692 = vmatpush1.msra.mxu0 %v130
    %693 = vmatprep.subr.mxu0 0.0
    %694 = vmatpush1.msra.mxu0 %v127
    %695 = vmatprep.subr.mxu0 0.0
    %696 = vmatpush1.msra.mxu0 %v124
    %697 = vmatprep.subr.mxu0 0.0
    %698 = vmatpush1.msra.mxu0 %v121
    %699 = vmatprep.subr.mxu0 0.0
    %700 = vmatpush1.msra.mxu0 %v118
    %701 = vmatprep.subr.mxu0 0.0
    %702 = vmatpush1.msra.mxu0 %v115
    %703 = vmatprep.subr.mxu0 0.0
    %704 = vmatpush2.msra.mxu0 0.0
    %705 = vmatprep.subr.mxu0 0.0
    %706 = vmatpush2.msra.mxu0 0.0
    %707 = vmatprep.subr.mxu0 0.0
    %708 = vmatpush2.msra.mxu0 0.0
    %709 = vmatprep.subr.mxu0 0.0
    %710 = vmatpush2.msra.mxu0 0.0
    %711 = vmatprep.subr.mxu0 0.0
    %712 = vmatpush2.msra.mxu0 0.0
    %713 = vmatprep.subr.mxu0 0.0
    %714 = vmatpush2.msra.mxu0 0.0
    %715 = vmatprep.subr.mxu0 0.0
    %716 = vmatpush2.msra.mxu0 0.0
    %717 = vmatprep.subr.mxu0 0.0
    %718 = vmatpush2.msra.mxu0 0.0
    %719 = vmatprep.subr.mxu0 0.0
    %720 = vmatpush2.msra.mxu0 0.0
    %721 = vmatprep.subr.mxu0 0.0
    %722 = vmatpush2.msra.mxu0 0.0
    %723 = vmatprep.subr.mxu0 0.0
    %724 = vmatpush2.msra.mxu0 0.0
    %725 = vmatprep.subr.mxu0 0.0
    %726 = vmatpush2.msra.mxu0 0.0
    %727 = vmatprep.subr.mxu0 0.0
    %728 = vmatpush2.msra.mxu0 0.0
    %729 = vmatprep.subr.mxu0 0.0
    %730 = vmatpush2.msra.mxu0 0.0
    %731 = vmatprep.subr.mxu0 0.0
    %732 = vmatpush2.msra.mxu0 0.0
    %733 = vmatprep.subr.mxu0 0.0
    %734 = vmatpush2.msra.mxu0 0.0
    %735 = vmatprep.mubr.f32.mxu0 0.0
    %736 = vmatmul.mubr.f32.gmra.mxu0 0.0
    %v737 = vpop.f32.mrf.mxu0
    %v738 = vadd.f32 0.0, %v737
    %v739 = vpop.f32.mrf.mxu0
    %740 = vmatprep.mubr.f32.mxu0 0.0
    %741 = vmatmul.mubr.f32.gmra.mxu0 0.0
    %v742 = vpop.f32.mrf.mxu0
    %v743 = vadd.f32 0.0, %v742
    %v744 = vpop.f32.mrf.mxu0
    %745 = vdwg.mxu0
    %v746 = vadd.f32 %v419, %v661
    %v747 = vadd.f32 %v423, %v667
    %v748 = vxor.u32 %v746, 2147483648
    %v749 = vxor.u32 %v747, 2147483648
    %v750 = vmul.f32 %v748, 1.442695
    %v751 = vpow.pop %v750
    %v752 = vmul.f32 %v749, 1.442695
    %v753 = vpow.pop %v752
    %v754 = vadd.f32 %v751, 1.0
    %v755 = vadd.f32 %v753, 1.0
    %v756 = vrcp.pop %v754
    %v757 = vmul.f32 1.0, %v756
    %v758 = vrcp.pop %v755
    %v759 = vmul.f32 1.0, %v758
    %v760 = vadd.f32 %v421, %v663
    %v761 = vadd.f32 %v425, %v669
    %v762 = vxor.u32 %v760, 2147483648
    %v763 = vxor.u32 %v761, 2147483648
    %v764 = vmul.f32 %v762, 1.442695
    %v765 = vpow.pop %v764
    %v766 = vmul.f32 %v763, 1.442695
    %v767 = vpow.pop %v766
    %v768 = vadd.f32 %v765, 1.0
    %v769 = vadd.f32 %v767, 1.0
    %v770 = vrcp.pop %v768
    %v771 = vmul.f32 1.0, %v770
    %v772 = vrcp.pop %v769
    %v773 = vmul.f32 1.0, %v772
    %v774 = vadd.f32 %v738, %v167
    %v775 = vadd.f32 %v743, %v167
    %v776 = vmul.f32 %v757, %v774
    %v777 = vmul.f32 %v759, %v775
    %v778 = vadd.f32 %v532, %v776
    %v779 = vadd.f32 %v535, %v777
    %v780 = vtanh.pop %v778
    %v781 = vtanh.pop %v779
    %v782 = vsub.f32 1.0, %v771
    %v783 = vsub.f32 1.0, %v773
    %v784 = vmul.f32 %v782, %v780
    %v785 = vmul.f32 %v783, %v781
    %v786 = vmul.f32 %v771, 0.0
    %v787 = vmul.f32 %v773, 0.0
    %v788 = vadd.f32 %v784, %v786
    %v789 = vadd.f32 %v785, %v787
    %v790 = vmul.f32 %v788, %v174
    %v791 = vmul.f32 %v789, %v174
    %792 = vadd.xlane.f32.xlu0 %v790
    %v793 = vpop.xlane.xlu0 %792
    %794 = vadd.xlane.f32.xlu0 %v791
    %v795 = vpop.xlane.xlu0 %794
    %796 = vmatprep.subr.mxu0 %v159
    %797 = vmatpush1.msra.mxu0 %v158
    %798 = vmatprep.subr.mxu0 %v156
    %799 = vmatpush1.msra.mxu0 %v155
    %800 = vmatprep.subr.mxu0 %v153
    %801 = vmatpush1.msra.mxu0 %v152
    %802 = vmatprep.subr.mxu0 %v150
    %803 = vmatpush1.msra.mxu0 %v149
    %804 = vmatprep.subr.mxu0 %v147
    %805 = vmatpush1.msra.mxu0 %v146
    %806 = vmatprep.subr.mxu0 %v144
    %807 = vmatpush1.msra.mxu0 %v143
    %808 = vmatprep.subr.mxu0 %v141
    %809 = vmatpush1.msra.mxu0 %v140
    %810 = vmatprep.subr.mxu0 %v138
    %811 = vmatpush1.msra.mxu0 %v137
    %812 = vmatprep.subr.mxu0 %v135
    %813 = vmatpush1.msra.mxu0 %v134
    %814 = vmatprep.subr.mxu0 %v132
    %815 = vmatpush1.msra.mxu0 %v131
    %816 = vmatprep.subr.mxu0 %v129
    %817 = vmatpush1.msra.mxu0 %v128
    %818 = vmatprep.subr.mxu0 %v126
    %819 = vmatpush1.msra.mxu0 %v125
    %820 = vmatprep.subr.mxu0 %v123
    %821 = vmatpush1.msra.mxu0 %v122
    %822 = vmatprep.subr.mxu0 %v120
    %823 = vmatpush1.msra.mxu0 %v119
    %824 = vmatprep.subr.mxu0 %v117
    %825 = vmatpush1.msra.mxu0 %v116
    %826 = vmatprep.subr.mxu0 %v114
    %827 = vmatpush1.msra.mxu0 %v113
    %828 = vmatprep.subr.mxu0 0.0
    %829 = vmatpush2.msra.mxu0 0.0
    %830 = vmatprep.subr.mxu0 0.0
    %831 = vmatpush2.msra.mxu0 0.0
    %832 = vmatprep.subr.mxu0 0.0
    %833 = vmatpush2.msra.mxu0 0.0
    %834 = vmatprep.subr.mxu0 0.0
    %835 = vmatpush2.msra.mxu0 0.0
    %836 = vmatprep.subr.mxu0 0.0
    %837 = vmatpush2.msra.mxu0 0.0
    %838 = vmatprep.subr.mxu0 0.0
    %839 = vmatpush2.msra.mxu0 0.0
    %840 = vmatprep.subr.mxu0 0.0
    %841 = vmatpush2.msra.mxu0 0.0
    %842 = vmatprep.subr.mxu0 0.0
    %843 = vmatpush2.msra.mxu0 0.0
    %844 = vmatprep.subr.mxu0 0.0
    %845 = vmatpush2.msra.mxu0 0.0
    %846 = vmatprep.subr.mxu0 0.0
    %847 = vmatpush2.msra.mxu0 0.0
    %848 = vmatprep.subr.mxu0 0.0
    %849 = vmatpush2.msra.mxu0 0.0
    %850 = vmatprep.subr.mxu0 0.0
    %851 = vmatpush2.msra.mxu0 0.0
    %852 = vmatprep.subr.mxu0 0.0
    %853 = vmatpush2.msra.mxu0 0.0
    %854 = vmatprep.subr.mxu0 0.0
    %855 = vmatpush2.msra.mxu0 0.0
    %856 = vmatprep.subr.mxu0 0.0
    %857 = vmatpush2.msra.mxu0 0.0
    %858 = vmatprep.subr.mxu0 0.0
    %859 = vmatpush2.msra.mxu0 0.0
    %860 = vmatprep.mubr.f32.mxu0 0.0
    %861 = vmatmul.mubr.f32.gmra.mxu0 %v788
    %v862 = vpop.f32.mrf.mxu0
    %v863 = vadd.f32 0.0, %v862
    %v864 = vpop.f32.mrf.mxu0
    %v865 = vadd.f32 0.0, %v864
    %866 = vmatprep.mubr.f32.mxu0 0.0
    %867 = vmatmul.mubr.f32.gmra.mxu0 %v789
    %v868 = vpop.f32.mrf.mxu0
    %v869 = vadd.f32 0.0, %v868
    %v870 = vpop.f32.mrf.mxu0
    %v871 = vadd.f32 0.0, %v870
    %872 = vdwg.mxu0
    %873 = vmatprep.subr.mxu0 0.0
    %874 = vmatpush1.msra.mxu0 %v160
    %875 = vmatprep.subr.mxu0 0.0
    %876 = vmatpush1.msra.mxu0 %v157
    %877 = vmatprep.subr.mxu0 0.0
    %878 = vmatpush1.msra.mxu0 %v154
    %879 = vmatprep.subr.mxu0 0.0
    %880 = vmatpush1.msra.mxu0 %v151
    %881 = vmatprep.subr.mxu0 0.0
    %882 = vmatpush1.msra.mxu0 %v148
    %883 = vmatprep.subr.mxu0 0.0
    %884 = vmatpush1.msra.mxu0 %v145
    %885 = vmatprep.subr.mxu0 0.0
    %886 = vmatpush1.msra.mxu0 %v142
    %887 = vmatprep.subr.mxu0 0.0
    %888 = vmatpush1.msra.mxu0 %v139
    %889 = vmatprep.subr.mxu0 0.0
    %890 = vmatpush1.msra.mxu0 %v136
    %891 = vmatprep.subr.mxu0 0.0
    %892 = vmatpush1.msra.mxu0 %v133
    %893 = vmatprep.subr.mxu0 0.0
    %894 = vmatpush1.msra.mxu0 %v130
    %895 = vmatprep.subr.mxu0 0.0
    %896 = vmatpush1.msra.mxu0 %v127
    %897 = vmatprep.subr.mxu0 0.0
    %898 = vmatpush1.msra.mxu0 %v124
    %899 = vmatprep.subr.mxu0 0.0
    %900 = vmatpush1.msra.mxu0 %v121
    %901 = vmatprep.subr.mxu0 0.0
    %902 = vmatpush1.msra.mxu0 %v118
    %903 = vmatprep.subr.mxu0 0.0
    %904 = vmatpush1.msra.mxu0 %v115
    %905 = vmatprep.subr.mxu0 0.0
    %906 = vmatpush2.msra.mxu0 0.0
    %907 = vmatprep.subr.mxu0 0.0
    %908 = vmatpush2.msra.mxu0 0.0
    %909 = vmatprep.subr.mxu0 0.0
    %910 = vmatpush2.msra.mxu0 0.0
    %911 = vmatprep.subr.mxu0 0.0
    %912 = vmatpush2.msra.mxu0 0.0
    %913 = vmatprep.subr.mxu0 0.0
    %914 = vmatpush2.msra.mxu0 0.0
    %915 = vmatprep.subr.mxu0 0.0
    %916 = vmatpush2.msra.mxu0 0.0
    %917 = vmatprep.subr.mxu0 0.0
    %918 = vmatpush2.msra.mxu0 0.0
    %919 = vmatprep.subr.mxu0 0.0
    %920 = vmatpush2.msra.mxu0 0.0
    %921 = vmatprep.subr.mxu0 0.0
    %922 = vmatpush2.msra.mxu0 0.0
    %923 = vmatprep.subr.mxu0 0.0
    %924 = vmatpush2.msra.mxu0 0.0
    %925 = vmatprep.subr.mxu0 0.0
    %926 = vmatpush2.msra.mxu0 0.0
    %927 = vmatprep.subr.mxu0 0.0
    %928 = vmatpush2.msra.mxu0 0.0
    %929 = vmatprep.subr.mxu0 0.0
    %930 = vmatpush2.msra.mxu0 0.0
    %931 = vmatprep.subr.mxu0 0.0
    %932 = vmatpush2.msra.mxu0 0.0
    %933 = vmatprep.subr.mxu0 0.0
    %934 = vmatpush2.msra.mxu0 0.0
    %935 = vmatprep.subr.mxu0 0.0
    %936 = vmatpush2.msra.mxu0 0.0
    %937 = vmatprep.mubr.f32.mxu0 0.0
    %938 = vmatmul.mubr.f32.gmra.mxu0 %v788
    %v939 = vpop.f32.mrf.mxu0
    %v940 = vadd.f32 0.0, %v939
    %v941 = vpop.f32.mrf.mxu0
    %942 = vmatprep.mubr.f32.mxu0 0.0
    %943 = vmatmul.mubr.f32.gmra.mxu0 %v789
    %v944 = vpop.f32.mrf.mxu0
    %v945 = vadd.f32 0.0, %v944
    %v946 = vpop.f32.mrf.mxu0
    %947 = vdwg.mxu0
    %v948 = vadd.f32 %v429, %v863
    %v949 = vadd.f32 %v433, %v869
    %v950 = vxor.u32 %v948, 2147483648
    %v951 = vxor.u32 %v949, 2147483648
    %v952 = vmul.f32 %v950, 1.442695
    %v953 = vpow.pop %v952
    %v954 = vmul.f32 %v951, 1.442695
    %v955 = vpow.pop %v954
    %v956 = vadd.f32 %v953, 1.0
    %v957 = vadd.f32 %v955, 1.0
    %v958 = vrcp.pop %v956
    %v959 = vmul.f32 1.0, %v958
    %v960 = vrcp.pop %v957
    %v961 = vmul.f32 1.0, %v960
    %v962 = vadd.f32 %v431, %v865
    %v963 = vadd.f32 %v435, %v871
    %v964 = vxor.u32 %v962, 2147483648
    %v965 = vxor.u32 %v963, 2147483648
    %v966 = vmul.f32 %v964, 1.442695
    %v967 = vpow.pop %v966
    %v968 = vmul.f32 %v965, 1.442695
    %v969 = vpow.pop %v968
    %v970 = vadd.f32 %v967, 1.0
    %v971 = vadd.f32 %v969, 1.0
    %v972 = vrcp.pop %v970
    %v973 = vmul.f32 1.0, %v972
    %v974 = vrcp.pop %v971
    %v975 = vmul.f32 1.0, %v974
    %v976 = vadd.f32 %v940, %v167
    %v977 = vadd.f32 %v945, %v167
    %v978 = vmul.f32 %v959, %v976
    %v979 = vmul.f32 %v961, %v977
    %v980 = vadd.f32 %v540, %v978
    %v981 = vadd.f32 %v543, %v979
    %v982 = vtanh.pop %v980
    %v983 = vtanh.pop %v981
    %v984 = vsub.f32 1.0, %v973
    %v985 = vsub.f32 1.0, %v975
    %v986 = vmul.f32 %v984, %v982
    %v987 = vmul.f32 %v985, %v983
    %v988 = vmul.f32 %v973, %v788
    %v989 = vmul.f32 %v975, %v789
    %v990 = vadd.f32 %v986, %v988
    %v991 = vadd.f32 %v987, %v989
    %v992 = vmul.f32 %v990, %v174
    %v993 = vmul.f32 %v991, %v174
    %994 = vadd.xlane.f32.xlu0 %v992
    %v995 = vpop.xlane.xlu0 %994
    %996 = vadd.xlane.f32.xlu0 %v993
    %v997 = vpop.xlane.xlu0 %996
    %998 = vmatprep.subr.mxu0 %v159
    %999 = vmatpush1.msra.mxu0 %v158
    %1000 = vmatprep.subr.mxu0 %v156
    %1001 = vmatpush1.msra.mxu0 %v155
    %1002 = vmatprep.subr.mxu0 %v153
    %1003 = vmatpush1.msra.mxu0 %v152
    %1004 = vmatprep.subr.mxu0 %v150
    %1005 = vmatpush1.msra.mxu0 %v149
    %1006 = vmatprep.subr.mxu0 %v147
    %1007 = vmatpush1.msra.mxu0 %v146
    %1008 = vmatprep.subr.mxu0 %v144
    %1009 = vmatpush1.msra.mxu0 %v143
    %1010 = vmatprep.subr.mxu0 %v141
    %1011 = vmatpush1.msra.mxu0 %v140
    %1012 = vmatprep.subr.mxu0 %v138
    %1013 = vmatpush1.msra.mxu0 %v137
    %1014 = vmatprep.subr.mxu0 %v135
    %1015 = vmatpush1.msra.mxu0 %v134
    %1016 = vmatprep.subr.mxu0 %v132
    %1017 = vmatpush1.msra.mxu0 %v131
    %1018 = vmatprep.subr.mxu0 %v129
    %1019 = vmatpush1.msra.mxu0 %v128
    %1020 = vmatprep.subr.mxu0 %v126
    %1021 = vmatpush1.msra.mxu0 %v125
    %1022 = vmatprep.subr.mxu0 %v123
    %1023 = vmatpush1.msra.mxu0 %v122
    %1024 = vmatprep.subr.mxu0 %v120
    %1025 = vmatpush1.msra.mxu0 %v119
    %1026 = vmatprep.subr.mxu0 %v117
    %1027 = vmatpush1.msra.mxu0 %v116
    %1028 = vmatprep.subr.mxu0 %v114
    %1029 = vmatpush1.msra.mxu0 %v113
    %1030 = vmatprep.subr.mxu0 0.0
    %1031 = vmatpush2.msra.mxu0 0.0
    %1032 = vmatprep.subr.mxu0 0.0
    %1033 = vmatpush2.msra.mxu0 0.0
    %1034 = vmatprep.subr.mxu0 0.0
    %1035 = vmatpush2.msra.mxu0 0.0
    %1036 = vmatprep.subr.mxu0 0.0
    %1037 = vmatpush2.msra.mxu0 0.0
    %1038 = vmatprep.subr.mxu0 0.0
    %1039 = vmatpush2.msra.mxu0 0.0
    %1040 = vmatprep.subr.mxu0 0.0
    %1041 = vmatpush2.msra.mxu0 0.0
    %1042 = vmatprep.subr.mxu0 0.0
    %1043 = vmatpush2.msra.mxu0 0.0
    %1044 = vmatprep.subr.mxu0 0.0
    %1045 = vmatpush2.msra.mxu0 0.0
    %1046 = vmatprep.subr.mxu0 0.0
    %1047 = vmatpush2.msra.mxu0 0.0
    %1048 = vmatprep.subr.mxu0 0.0
    %1049 = vmatpush2.msra.mxu0 0.0
    %1050 = vmatprep.subr.mxu0 0.0
    %1051 = vmatpush2.msra.mxu0 0.0
    %1052 = vmatprep.subr.mxu0 0.0
    %1053 = vmatpush2.msra.mxu0 0.0
    %1054 = vmatprep.subr.mxu0 0.0
    %1055 = vmatpush2.msra.mxu0 0.0
    %1056 = vmatprep.subr.mxu0 0.0
    %1057 = vmatpush2.msra.mxu0 0.0
    %1058 = vmatprep.subr.mxu0 0.0
    %1059 = vmatpush2.msra.mxu0 0.0
    %1060 = vmatprep.subr.mxu0 0.0
    %1061 = vmatpush2.msra.mxu0 0.0
    %1062 = vmatprep.mubr.f32.mxu0 0.0
    %1063 = vmatmul.mubr.f32.gmra.mxu0 %v990
    %v1064 = vpop.f32.mrf.mxu0
    %v1065 = vadd.f32 0.0, %v1064
    %v1066 = vpop.f32.mrf.mxu0
    %v1067 = vadd.f32 0.0, %v1066
    %1068 = vmatprep.mubr.f32.mxu0 0.0
    %1069 = vmatmul.mubr.f32.gmra.mxu0 %v991
    %v1070 = vpop.f32.mrf.mxu0
    %v1071 = vadd.f32 0.0, %v1070
    %v1072 = vpop.f32.mrf.mxu0
    %v1073 = vadd.f32 0.0, %v1072
    %1074 = vdwg.mxu0
    %1075 = vmatprep.subr.mxu0 0.0
    %1076 = vmatpush1.msra.mxu0 %v160
    %1077 = vmatprep.subr.mxu0 0.0
    %1078 = vmatpush1.msra.mxu0 %v157
    %1079 = vmatprep.subr.mxu0 0.0
    %1080 = vmatpush1.msra.mxu0 %v154
    %1081 = vmatprep.subr.mxu0 0.0
    %1082 = vmatpush1.msra.mxu0 %v151
    %1083 = vmatprep.subr.mxu0 0.0
    %1084 = vmatpush1.msra.mxu0 %v148
    %1085 = vmatprep.subr.mxu0 0.0
    %1086 = vmatpush1.msra.mxu0 %v145
    %1087 = vmatprep.subr.mxu0 0.0
    %1088 = vmatpush1.msra.mxu0 %v142
    %1089 = vmatprep.subr.mxu0 0.0
    %1090 = vmatpush1.msra.mxu0 %v139
    %1091 = vmatprep.subr.mxu0 0.0
    %1092 = vmatpush1.msra.mxu0 %v136
    %1093 = vmatprep.subr.mxu0 0.0
    %1094 = vmatpush1.msra.mxu0 %v133
    %1095 = vmatprep.subr.mxu0 0.0
    %1096 = vmatpush1.msra.mxu0 %v130
    %1097 = vmatprep.subr.mxu0 0.0
    %1098 = vmatpush1.msra.mxu0 %v127
    %1099 = vmatprep.subr.mxu0 0.0
    %1100 = vmatpush1.msra.mxu0 %v124
    %1101 = vmatprep.subr.mxu0 0.0
    %1102 = vmatpush1.msra.mxu0 %v121
    %1103 = vmatprep.subr.mxu0 0.0
    %1104 = vmatpush1.msra.mxu0 %v118
    %1105 = vmatprep.subr.mxu0 0.0
    %1106 = vmatpush1.msra.mxu0 %v115
    %1107 = vmatprep.subr.mxu0 0.0
    %1108 = vmatpush2.msra.mxu0 0.0
    %1109 = vmatprep.subr.mxu0 0.0
    %1110 = vmatpush2.msra.mxu0 0.0
    %1111 = vmatprep.subr.mxu0 0.0
    %1112 = vmatpush2.msra.mxu0 0.0
    %1113 = vmatprep.subr.mxu0 0.0
    %1114 = vmatpush2.msra.mxu0 0.0
    %1115 = vmatprep.subr.mxu0 0.0
    %1116 = vmatpush2.msra.mxu0 0.0
    %1117 = vmatprep.subr.mxu0 0.0
    %1118 = vmatpush2.msra.mxu0 0.0
    %1119 = vmatprep.subr.mxu0 0.0
    %1120 = vmatpush2.msra.mxu0 0.0
    %1121 = vmatprep.subr.mxu0 0.0
    %1122 = vmatpush2.msra.mxu0 0.0
    %1123 = vmatprep.subr.mxu0 0.0
    %1124 = vmatpush2.msra.mxu0 0.0
    %1125 = vmatprep.subr.mxu0 0.0
    %1126 = vmatpush2.msra.mxu0 0.0
    %1127 = vmatprep.subr.mxu0 0.0
    %1128 = vmatpush2.msra.mxu0 0.0
    %1129 = vmatprep.subr.mxu0 0.0
    %1130 = vmatpush2.msra.mxu0 0.0
    %1131 = vmatprep.subr.mxu0 0.0
    %1132 = vmatpush2.msra.mxu0 0.0
    %1133 = vmatprep.subr.mxu0 0.0
    %1134 = vmatpush2.msra.mxu0 0.0
    %1135 = vmatprep.subr.mxu0 0.0
    %1136 = vmatpush2.msra.mxu0 0.0
    %1137 = vmatprep.subr.mxu0 0.0
    %1138 = vmatpush2.msra.mxu0 0.0
    %1139 = vmatprep.mubr.f32.mxu0 0.0
    %1140 = vmatmul.mubr.f32.gmra.mxu0 %v990
    %v1141 = vpop.f32.mrf.mxu0
    %v1142 = vadd.f32 0.0, %v1141
    %v1143 = vpop.f32.mrf.mxu0
    %1144 = vmatprep.mubr.f32.mxu0 0.0
    %1145 = vmatmul.mubr.f32.gmra.mxu0 %v991
    %v1146 = vpop.f32.mrf.mxu0
    %v1147 = vadd.f32 0.0, %v1146
    %v1148 = vpop.f32.mrf.mxu0
    %1149 = vdwg.mxu0
    %v1150 = vadd.f32 %v439, %v1065
    %v1151 = vadd.f32 %v443, %v1071
    %v1152 = vxor.u32 %v1150, 2147483648
    %v1153 = vxor.u32 %v1151, 2147483648
    %v1154 = vmul.f32 %v1152, 1.442695
    %v1155 = vpow.pop %v1154
    %v1156 = vmul.f32 %v1153, 1.442695
    %v1157 = vpow.pop %v1156
    %v1158 = vadd.f32 %v1155, 1.0
    %v1159 = vadd.f32 %v1157, 1.0
    %v1160 = vrcp.pop %v1158
    %v1161 = vmul.f32 1.0, %v1160
    %v1162 = vrcp.pop %v1159
    %v1163 = vmul.f32 1.0, %v1162
    %v1164 = vadd.f32 %v441, %v1067
    %v1165 = vadd.f32 %v445, %v1073
    %v1166 = vxor.u32 %v1164, 2147483648
    %v1167 = vxor.u32 %v1165, 2147483648
    %v1168 = vmul.f32 %v1166, 1.442695
    %v1169 = vpow.pop %v1168
    %v1170 = vmul.f32 %v1167, 1.442695
    %v1171 = vpow.pop %v1170
    %v1172 = vadd.f32 %v1169, 1.0
    %v1173 = vadd.f32 %v1171, 1.0
    %v1174 = vrcp.pop %v1172
    %v1175 = vmul.f32 1.0, %v1174
    %v1176 = vrcp.pop %v1173
    %v1177 = vmul.f32 1.0, %v1176
    %v1178 = vadd.f32 %v1142, %v167
    %v1179 = vadd.f32 %v1147, %v167
    %v1180 = vmul.f32 %v1161, %v1178
    %v1181 = vmul.f32 %v1163, %v1179
    %v1182 = vadd.f32 %v548, %v1180
    %v1183 = vadd.f32 %v551, %v1181
    %v1184 = vtanh.pop %v1182
    %v1185 = vtanh.pop %v1183
    %v1186 = vsub.f32 1.0, %v1175
    %v1187 = vsub.f32 1.0, %v1177
    %v1188 = vmul.f32 %v1186, %v1184
    %v1189 = vmul.f32 %v1187, %v1185
    %v1190 = vmul.f32 %v1175, %v990
    %v1191 = vmul.f32 %v1177, %v991
    %v1192 = vadd.f32 %v1188, %v1190
    %v1193 = vadd.f32 %v1189, %v1191
    %v1194 = vmul.f32 %v1192, %v174
    %v1195 = vmul.f32 %v1193, %v174
    %1196 = vadd.xlane.f32.xlu0 %v1194
    %v1197 = vpop.xlane.xlu0 %1196
    %1198 = vadd.xlane.f32.xlu0 %v1195
    %v1199 = vpop.xlane.xlu0 %1198
    %1200 = vmatprep.subr.mxu0 %v159
    %1201 = vmatpush1.msra.mxu0 %v158
    %1202 = vmatprep.subr.mxu0 %v156
    %1203 = vmatpush1.msra.mxu0 %v155
    %1204 = vmatprep.subr.mxu0 %v153
    %1205 = vmatpush1.msra.mxu0 %v152
    %1206 = vmatprep.subr.mxu0 %v150
    %1207 = vmatpush1.msra.mxu0 %v149
    %1208 = vmatprep.subr.mxu0 %v147
    %1209 = vmatpush1.msra.mxu0 %v146
    %1210 = vmatprep.subr.mxu0 %v144
    %1211 = vmatpush1.msra.mxu0 %v143
    %1212 = vmatprep.subr.mxu0 %v141
    %1213 = vmatpush1.msra.mxu0 %v140
    %1214 = vmatprep.subr.mxu0 %v138
    %1215 = vmatpush1.msra.mxu0 %v137
    %1216 = vmatprep.subr.mxu0 %v135
    %1217 = vmatpush1.msra.mxu0 %v134
    %1218 = vmatprep.subr.mxu0 %v132
    %1219 = vmatpush1.msra.mxu0 %v131
    %1220 = vmatprep.subr.mxu0 %v129
    %1221 = vmatpush1.msra.mxu0 %v128
    %1222 = vmatprep.subr.mxu0 %v126
    %1223 = vmatpush1.msra.mxu0 %v125
    %1224 = vmatprep.subr.mxu0 %v123
    %1225 = vmatpush1.msra.mxu0 %v122
    %1226 = vmatprep.subr.mxu0 %v120
    %1227 = vmatpush1.msra.mxu0 %v119
    %1228 = vmatprep.subr.mxu0 %v117
    %1229 = vmatpush1.msra.mxu0 %v116
    %1230 = vmatprep.subr.mxu0 %v114
    %1231 = vmatpush1.msra.mxu0 %v113
    %1232 = vmatprep.subr.mxu0 0.0
    %1233 = vmatpush2.msra.mxu0 0.0
    %1234 = vmatprep.subr.mxu0 0.0
    %1235 = vmatpush2.msra.mxu0 0.0
    %1236 = vmatprep.subr.mxu0 0.0
    %1237 = vmatpush2.msra.mxu0 0.0
    %1238 = vmatprep.subr.mxu0 0.0
    %1239 = vmatpush2.msra.mxu0 0.0
    %1240 = vmatprep.subr.mxu0 0.0
    %1241 = vmatpush2.msra.mxu0 0.0
    %1242 = vmatprep.subr.mxu0 0.0
    %1243 = vmatpush2.msra.mxu0 0.0
    %1244 = vmatprep.subr.mxu0 0.0
    %1245 = vmatpush2.msra.mxu0 0.0
    %1246 = vmatprep.subr.mxu0 0.0
    %1247 = vmatpush2.msra.mxu0 0.0
    %1248 = vmatprep.subr.mxu0 0.0
    %1249 = vmatpush2.msra.mxu0 0.0
    %1250 = vmatprep.subr.mxu0 0.0
    %1251 = vmatpush2.msra.mxu0 0.0
    %1252 = vmatprep.subr.mxu0 0.0
    %1253 = vmatpush2.msra.mxu0 0.0
    %1254 = vmatprep.subr.mxu0 0.0
    %1255 = vmatpush2.msra.mxu0 0.0
    %1256 = vmatprep.subr.mxu0 0.0
    %1257 = vmatpush2.msra.mxu0 0.0
    %1258 = vmatprep.subr.mxu0 0.0
    %1259 = vmatpush2.msra.mxu0 0.0
    %1260 = vmatprep.subr.mxu0 0.0
    %1261 = vmatpush2.msra.mxu0 0.0
    %1262 = vmatprep.subr.mxu0 0.0
    %1263 = vmatpush2.msra.mxu0 0.0
    %1264 = vmatprep.mubr.f32.mxu0 0.0
    %1265 = vmatmul.mubr.f32.gmra.mxu0 %v1192
    %v1266 = vpop.f32.mrf.mxu0
    %v1267 = vadd.f32 0.0, %v1266
    %v1268 = vpop.f32.mrf.mxu0
    %v1269 = vadd.f32 0.0, %v1268
    %1270 = vmatprep.mubr.f32.mxu0 0.0
    %1271 = vmatmul.mubr.f32.gmra.mxu0 %v1193
    %v1272 = vpop.f32.mrf.mxu0
    %v1273 = vadd.f32 0.0, %v1272
    %v1274 = vpop.f32.mrf.mxu0
    %v1275 = vadd.f32 0.0, %v1274
    %1276 = vdwg.mxu0
    %1277 = vmatprep.subr.mxu0 0.0
    %1278 = vmatpush1.msra.mxu0 %v160
    %1279 = vmatprep.subr.mxu0 0.0
    %1280 = vmatpush1.msra.mxu0 %v157
    %1281 = vmatprep.subr.mxu0 0.0
    %1282 = vmatpush1.msra.mxu0 %v154
    %1283 = vmatprep.subr.mxu0 0.0
    %1284 = vmatpush1.msra.mxu0 %v151
    %1285 = vmatprep.subr.mxu0 0.0
    %1286 = vmatpush1.msra.mxu0 %v148
    %1287 = vmatprep.subr.mxu0 0.0
    %1288 = vmatpush1.msra.mxu0 %v145
    %1289 = vmatprep.subr.mxu0 0.0
    %1290 = vmatpush1.msra.mxu0 %v142
    %1291 = vmatprep.subr.mxu0 0.0
    %1292 = vmatpush1.msra.mxu0 %v139
    %1293 = vmatprep.subr.mxu0 0.0
    %1294 = vmatpush1.msra.mxu0 %v136
    %1295 = vmatprep.subr.mxu0 0.0
    %1296 = vmatpush1.msra.mxu0 %v133
    %1297 = vmatprep.subr.mxu0 0.0
    %1298 = vmatpush1.msra.mxu0 %v130
    %1299 = vmatprep.subr.mxu0 0.0
    %1300 = vmatpush1.msra.mxu0 %v127
    %1301 = vmatprep.subr.mxu0 0.0
    %1302 = vmatpush1.msra.mxu0 %v124
    %1303 = vmatprep.subr.mxu0 0.0
    %1304 = vmatpush1.msra.mxu0 %v121
    %1305 = vmatprep.subr.mxu0 0.0
    %1306 = vmatpush1.msra.mxu0 %v118
    %1307 = vmatprep.subr.mxu0 0.0
    %1308 = vmatpush1.msra.mxu0 %v115
    %1309 = vmatprep.subr.mxu0 0.0
    %1310 = vmatpush2.msra.mxu0 0.0
    %1311 = vmatprep.subr.mxu0 0.0
    %1312 = vmatpush2.msra.mxu0 0.0
    %1313 = vmatprep.subr.mxu0 0.0
    %1314 = vmatpush2.msra.mxu0 0.0
    %1315 = vmatprep.subr.mxu0 0.0
    %1316 = vmatpush2.msra.mxu0 0.0
    %1317 = vmatprep.subr.mxu0 0.0
    %1318 = vmatpush2.msra.mxu0 0.0
    %1319 = vmatprep.subr.mxu0 0.0
    %1320 = vmatpush2.msra.mxu0 0.0
    %1321 = vmatprep.subr.mxu0 0.0
    %1322 = vmatpush2.msra.mxu0 0.0
    %1323 = vmatprep.subr.mxu0 0.0
    %1324 = vmatpush2.msra.mxu0 0.0
    %1325 = vmatprep.subr.mxu0 0.0
    %1326 = vmatpush2.msra.mxu0 0.0
    %1327 = vmatprep.subr.mxu0 0.0
    %1328 = vmatpush2.msra.mxu0 0.0
    %1329 = vmatprep.subr.mxu0 0.0
    %1330 = vmatpush2.msra.mxu0 0.0
    %1331 = vmatprep.subr.mxu0 0.0
    %1332 = vmatpush2.msra.mxu0 0.0
    %1333 = vmatprep.subr.mxu0 0.0
    %1334 = vmatpush2.msra.mxu0 0.0
    %1335 = vmatprep.subr.mxu0 0.0
    %1336 = vmatpush2.msra.mxu0 0.0
    %1337 = vmatprep.subr.mxu0 0.0
    %1338 = vmatpush2.msra.mxu0 0.0
    %1339 = vmatprep.subr.mxu0 0.0
    %1340 = vmatpush2.msra.mxu0 0.0
    %1341 = vmatprep.mubr.f32.mxu0 0.0
    %1342 = vmatmul.mubr.f32.gmra.mxu0 %v1192
    %v1343 = vpop.f32.mrf.mxu0
    %v1344 = vadd.f32 0.0, %v1343
    %v1345 = vpop.f32.mrf.mxu0
    %1346 = vmatprep.mubr.f32.mxu0 0.0
    %1347 = vmatmul.mubr.f32.gmra.mxu0 %v1193
    %v1348 = vpop.f32.mrf.mxu0
    %v1349 = vadd.f32 0.0, %v1348
    %v1350 = vpop.f32.mrf.mxu0
    %1351 = vdwg.mxu0
    %v1352 = vadd.f32 %v449, %v1267
    %v1353 = vadd.f32 %v453, %v1273
    %v1354 = vxor.u32 %v1352, 2147483648
    %v1355 = vxor.u32 %v1353, 2147483648
    %v1356 = vmul.f32 %v1354, 1.442695
    %v1357 = vpow.pop %v1356
    %v1358 = vmul.f32 %v1355, 1.442695
    %v1359 = vpow.pop %v1358
    %v1360 = vadd.f32 %v1357, 1.0
    %v1361 = vadd.f32 %v1359, 1.0
    %v1362 = vrcp.pop %v1360
    %v1363 = vmul.f32 1.0, %v1362
    %v1364 = vrcp.pop %v1361
    %v1365 = vmul.f32 1.0, %v1364
    %v1366 = vadd.f32 %v451, %v1269
    %v1367 = vadd.f32 %v455, %v1275
    %v1368 = vxor.u32 %v1366, 2147483648
    %v1369 = vxor.u32 %v1367, 2147483648
    %v1370 = vmul.f32 %v1368, 1.442695
    %v1371 = vpow.pop %v1370
    %v1372 = vmul.f32 %v1369, 1.442695
    %v1373 = vpow.pop %v1372
    %v1374 = vadd.f32 %v1371, 1.0
    %v1375 = vadd.f32 %v1373, 1.0
    %v1376 = vrcp.pop %v1374
    %v1377 = vmul.f32 1.0, %v1376
    %v1378 = vrcp.pop %v1375
    %v1379 = vmul.f32 1.0, %v1378
    %v1380 = vadd.f32 %v1344, %v167
    %v1381 = vadd.f32 %v1349, %v167
    %v1382 = vmul.f32 %v1363, %v1380
    %v1383 = vmul.f32 %v1365, %v1381
    %v1384 = vadd.f32 %v556, %v1382
    %v1385 = vadd.f32 %v559, %v1383
    %v1386 = vtanh.pop %v1384
    %v1387 = vtanh.pop %v1385
    %v1388 = vsub.f32 1.0, %v1377
    %v1389 = vsub.f32 1.0, %v1379
    %v1390 = vmul.f32 %v1388, %v1386
    %v1391 = vmul.f32 %v1389, %v1387
    %v1392 = vmul.f32 %v1377, %v1192
    %v1393 = vmul.f32 %v1379, %v1193
    %v1394 = vadd.f32 %v1390, %v1392
    %v1395 = vadd.f32 %v1391, %v1393
    %v1396 = vmul.f32 %v1394, %v174
    %v1397 = vmul.f32 %v1395, %v174
    %1398 = vadd.xlane.f32.xlu0 %v1396
    %v1399 = vpop.xlane.xlu0 %1398
    %1400 = vadd.xlane.f32.xlu0 %v1397
    %v1401 = vpop.xlane.xlu0 %1400
    %1402 = vmatprep.subr.mxu0 %v159
    %1403 = vmatpush1.msra.mxu0 %v158
    %1404 = vmatprep.subr.mxu0 %v156
    %1405 = vmatpush1.msra.mxu0 %v155
    %1406 = vmatprep.subr.mxu0 %v153
    %1407 = vmatpush1.msra.mxu0 %v152
    %1408 = vmatprep.subr.mxu0 %v150
    %1409 = vmatpush1.msra.mxu0 %v149
    %1410 = vmatprep.subr.mxu0 %v147
    %1411 = vmatpush1.msra.mxu0 %v146
    %1412 = vmatprep.subr.mxu0 %v144
    %1413 = vmatpush1.msra.mxu0 %v143
    %1414 = vmatprep.subr.mxu0 %v141
    %1415 = vmatpush1.msra.mxu0 %v140
    %1416 = vmatprep.subr.mxu0 %v138
    %1417 = vmatpush1.msra.mxu0 %v137
    %1418 = vmatprep.subr.mxu0 %v135
    %1419 = vmatpush1.msra.mxu0 %v134
    %1420 = vmatprep.subr.mxu0 %v132
    %1421 = vmatpush1.msra.mxu0 %v131
    %1422 = vmatprep.subr.mxu0 %v129
    %1423 = vmatpush1.msra.mxu0 %v128
    %1424 = vmatprep.subr.mxu0 %v126
    %1425 = vmatpush1.msra.mxu0 %v125
    %1426 = vmatprep.subr.mxu0 %v123
    %1427 = vmatpush1.msra.mxu0 %v122
    %1428 = vmatprep.subr.mxu0 %v120
    %1429 = vmatpush1.msra.mxu0 %v119
    %1430 = vmatprep.subr.mxu0 %v117
    %1431 = vmatpush1.msra.mxu0 %v116
    %1432 = vmatprep.subr.mxu0 %v114
    %1433 = vmatpush1.msra.mxu0 %v113
    %1434 = vmatprep.subr.mxu0 0.0
    %1435 = vmatpush2.msra.mxu0 0.0
    %1436 = vmatprep.subr.mxu0 0.0
    %1437 = vmatpush2.msra.mxu0 0.0
    %1438 = vmatprep.subr.mxu0 0.0
    %1439 = vmatpush2.msra.mxu0 0.0
    %1440 = vmatprep.subr.mxu0 0.0
    %1441 = vmatpush2.msra.mxu0 0.0
    %1442 = vmatprep.subr.mxu0 0.0
    %1443 = vmatpush2.msra.mxu0 0.0
    %1444 = vmatprep.subr.mxu0 0.0
    %1445 = vmatpush2.msra.mxu0 0.0
    %1446 = vmatprep.subr.mxu0 0.0
    %1447 = vmatpush2.msra.mxu0 0.0
    %1448 = vmatprep.subr.mxu0 0.0
    %1449 = vmatpush2.msra.mxu0 0.0
    %1450 = vmatprep.subr.mxu0 0.0
    %1451 = vmatpush2.msra.mxu0 0.0
    %1452 = vmatprep.subr.mxu0 0.0
    %1453 = vmatpush2.msra.mxu0 0.0
    %1454 = vmatprep.subr.mxu0 0.0
    %1455 = vmatpush2.msra.mxu0 0.0
    %1456 = vmatprep.subr.mxu0 0.0
    %1457 = vmatpush2.msra.mxu0 0.0
    %1458 = vmatprep.subr.mxu0 0.0
    %1459 = vmatpush2.msra.mxu0 0.0
    %1460 = vmatprep.subr.mxu0 0.0
    %1461 = vmatpush2.msra.mxu0 0.0
    %1462 = vmatprep.subr.mxu0 0.0
    %1463 = vmatpush2.msra.mxu0 0.0
    %1464 = vmatprep.subr.mxu0 0.0
    %1465 = vmatpush2.msra.mxu0 0.0
    %1466 = vmatprep.mubr.f32.mxu0 0.0
    %1467 = vmatmul.mubr.f32.gmra.mxu0 %v1394
    %v1468 = vpop.f32.mrf.mxu0
    %v1469 = vadd.f32 0.0, %v1468
    %v1470 = vpop.f32.mrf.mxu0
    %v1471 = vadd.f32 0.0, %v1470
    %1472 = vmatprep.mubr.f32.mxu0 0.0
    %1473 = vmatmul.mubr.f32.gmra.mxu0 %v1395
    %v1474 = vpop.f32.mrf.mxu0
    %v1475 = vadd.f32 0.0, %v1474
    %v1476 = vpop.f32.mrf.mxu0
    %v1477 = vadd.f32 0.0, %v1476
    %1478 = vdwg.mxu0
    %1479 = vmatprep.subr.mxu0 0.0
    %1480 = vmatpush1.msra.mxu0 %v160
    %1481 = vmatprep.subr.mxu0 0.0
    %1482 = vmatpush1.msra.mxu0 %v157
    %1483 = vmatprep.subr.mxu0 0.0
    %1484 = vmatpush1.msra.mxu0 %v154
    %1485 = vmatprep.subr.mxu0 0.0
    %1486 = vmatpush1.msra.mxu0 %v151
    %1487 = vmatprep.subr.mxu0 0.0
    %1488 = vmatpush1.msra.mxu0 %v148
    %1489 = vmatprep.subr.mxu0 0.0
    %1490 = vmatpush1.msra.mxu0 %v145
    %1491 = vmatprep.subr.mxu0 0.0
    %1492 = vmatpush1.msra.mxu0 %v142
    %1493 = vmatprep.subr.mxu0 0.0
    %1494 = vmatpush1.msra.mxu0 %v139
    %1495 = vmatprep.subr.mxu0 0.0
    %1496 = vmatpush1.msra.mxu0 %v136
    %1497 = vmatprep.subr.mxu0 0.0
    %1498 = vmatpush1.msra.mxu0 %v133
    %1499 = vmatprep.subr.mxu0 0.0
    %1500 = vmatpush1.msra.mxu0 %v130
    %1501 = vmatprep.subr.mxu0 0.0
    %1502 = vmatpush1.msra.mxu0 %v127
    %1503 = vmatprep.subr.mxu0 0.0
    %1504 = vmatpush1.msra.mxu0 %v124
    %1505 = vmatprep.subr.mxu0 0.0
    %1506 = vmatpush1.msra.mxu0 %v121
    %1507 = vmatprep.subr.mxu0 0.0
    %1508 = vmatpush1.msra.mxu0 %v118
    %1509 = vmatprep.subr.mxu0 0.0
    %1510 = vmatpush1.msra.mxu0 %v115
    %1511 = vmatprep.subr.mxu0 0.0
    %1512 = vmatpush2.msra.mxu0 0.0
    %1513 = vmatprep.subr.mxu0 0.0
    %1514 = vmatpush2.msra.mxu0 0.0
    %1515 = vmatprep.subr.mxu0 0.0
    %1516 = vmatpush2.msra.mxu0 0.0
    %1517 = vmatprep.subr.mxu0 0.0
    %1518 = vmatpush2.msra.mxu0 0.0
    %1519 = vmatprep.subr.mxu0 0.0
    %1520 = vmatpush2.msra.mxu0 0.0
    %1521 = vmatprep.subr.mxu0 0.0
    %1522 = vmatpush2.msra.mxu0 0.0
    %1523 = vmatprep.subr.mxu0 0.0
    %1524 = vmatpush2.msra.mxu0 0.0
    %1525 = vmatprep.subr.mxu0 0.0
    %1526 = vmatpush2.msra.mxu0 0.0
    %1527 = vmatprep.subr.mxu0 0.0
    %1528 = vmatpush2.msra.mxu0 0.0
    %1529 = vmatprep.subr.mxu0 0.0
    %1530 = vmatpush2.msra.mxu0 0.0
    %1531 = vmatprep.subr.mxu0 0.0
    %1532 = vmatpush2.msra.mxu0 0.0
    %1533 = vmatprep.subr.mxu0 0.0
    %1534 = vmatpush2.msra.mxu0 0.0
    %1535 = vmatprep.subr.mxu0 0.0
    %1536 = vmatpush2.msra.mxu0 0.0
    %1537 = vmatprep.subr.mxu0 0.0
    %1538 = vmatpush2.msra.mxu0 0.0
    %1539 = vmatprep.subr.mxu0 0.0
    %1540 = vmatpush2.msra.mxu0 0.0
    %1541 = vmatprep.subr.mxu0 0.0
    %1542 = vmatpush2.msra.mxu0 0.0
    %1543 = vmatprep.mubr.f32.mxu0 0.0
    %1544 = vmatmul.mubr.f32.gmra.mxu0 %v1394
    %v1545 = vpop.f32.mrf.mxu0
    %v1546 = vadd.f32 0.0, %v1545
    %v1547 = vpop.f32.mrf.mxu0
    %1548 = vmatprep.mubr.f32.mxu0 0.0
    %1549 = vmatmul.mubr.f32.gmra.mxu0 %v1395
    %v1550 = vpop.f32.mrf.mxu0
    %v1551 = vadd.f32 0.0, %v1550
    %v1552 = vpop.f32.mrf.mxu0
    %1553 = vdwg.mxu0
    %v1554 = vadd.f32 %v459, %v1469
    %v1555 = vadd.f32 %v463, %v1475
    %v1556 = vxor.u32 %v1554, 2147483648
    %v1557 = vxor.u32 %v1555, 2147483648
    %v1558 = vmul.f32 %v1556, 1.442695
    %v1559 = vpow.pop %v1558
    %v1560 = vmul.f32 %v1557, 1.442695
    %v1561 = vpow.pop %v1560
    %v1562 = vadd.f32 %v1559, 1.0
    %v1563 = vadd.f32 %v1561, 1.0
    %v1564 = vrcp.pop %v1562
    %v1565 = vmul.f32 1.0, %v1564
    %v1566 = vrcp.pop %v1563
    %v1567 = vmul.f32 1.0, %v1566
    %v1568 = vadd.f32 %v461, %v1471
    %v1569 = vadd.f32 %v465, %v1477
    %v1570 = vxor.u32 %v1568, 2147483648
    %v1571 = vxor.u32 %v1569, 2147483648
    %v1572 = vmul.f32 %v1570, 1.442695
    %v1573 = vpow.pop %v1572
    %v1574 = vmul.f32 %v1571, 1.442695
    %v1575 = vpow.pop %v1574
    %v1576 = vadd.f32 %v1573, 1.0
    %v1577 = vadd.f32 %v1575, 1.0
    %v1578 = vrcp.pop %v1576
    %v1579 = vmul.f32 1.0, %v1578
    %v1580 = vrcp.pop %v1577
    %v1581 = vmul.f32 1.0, %v1580
    %v1582 = vadd.f32 %v1546, %v167
    %v1583 = vadd.f32 %v1551, %v167
    %v1584 = vmul.f32 %v1565, %v1582
    %v1585 = vmul.f32 %v1567, %v1583
    %v1586 = vadd.f32 %v564, %v1584
    %v1587 = vadd.f32 %v567, %v1585
    %v1588 = vtanh.pop %v1586
    %v1589 = vtanh.pop %v1587
    %v1590 = vsub.f32 1.0, %v1579
    %v1591 = vsub.f32 1.0, %v1581
    %v1592 = vmul.f32 %v1590, %v1588
    %v1593 = vmul.f32 %v1591, %v1589
    %v1594 = vmul.f32 %v1579, %v1394
    %v1595 = vmul.f32 %v1581, %v1395
    %v1596 = vadd.f32 %v1592, %v1594
    %v1597 = vadd.f32 %v1593, %v1595
    %v1598 = vmul.f32 %v1596, %v174
    %v1599 = vmul.f32 %v1597, %v174
    %1600 = vadd.xlane.f32.xlu0 %v1598
    %v1601 = vpop.xlane.xlu0 %1600
    %1602 = vadd.xlane.f32.xlu0 %v1599
    %v1603 = vpop.xlane.xlu0 %1602
    %1604 = vmatprep.subr.mxu0 %v159
    %1605 = vmatpush1.msra.mxu0 %v158
    %1606 = vmatprep.subr.mxu0 %v156
    %1607 = vmatpush1.msra.mxu0 %v155
    %1608 = vmatprep.subr.mxu0 %v153
    %1609 = vmatpush1.msra.mxu0 %v152
    %1610 = vmatprep.subr.mxu0 %v150
    %1611 = vmatpush1.msra.mxu0 %v149
    %1612 = vmatprep.subr.mxu0 %v147
    %1613 = vmatpush1.msra.mxu0 %v146
    %1614 = vmatprep.subr.mxu0 %v144
    %1615 = vmatpush1.msra.mxu0 %v143
    %1616 = vmatprep.subr.mxu0 %v141
    %1617 = vmatpush1.msra.mxu0 %v140
    %1618 = vmatprep.subr.mxu0 %v138
    %1619 = vmatpush1.msra.mxu0 %v137
    %1620 = vmatprep.subr.mxu0 %v135
    %1621 = vmatpush1.msra.mxu0 %v134
    %1622 = vmatprep.subr.mxu0 %v132
    %1623 = vmatpush1.msra.mxu0 %v131
    %1624 = vmatprep.subr.mxu0 %v129
    %1625 = vmatpush1.msra.mxu0 %v128
    %1626 = vmatprep.subr.mxu0 %v126
    %1627 = vmatpush1.msra.mxu0 %v125
    %1628 = vmatprep.subr.mxu0 %v123
    %1629 = vmatpush1.msra.mxu0 %v122
    %1630 = vmatprep.subr.mxu0 %v120
    %1631 = vmatpush1.msra.mxu0 %v119
    %1632 = vmatprep.subr.mxu0 %v117
    %1633 = vmatpush1.msra.mxu0 %v116
    %1634 = vmatprep.subr.mxu0 %v114
    %1635 = vmatpush1.msra.mxu0 %v113
    %1636 = vmatprep.subr.mxu0 0.0
    %1637 = vmatpush2.msra.mxu0 0.0
    %1638 = vmatprep.subr.mxu0 0.0
    %1639 = vmatpush2.msra.mxu0 0.0
    %1640 = vmatprep.subr.mxu0 0.0
    %1641 = vmatpush2.msra.mxu0 0.0
    %1642 = vmatprep.subr.mxu0 0.0
    %1643 = vmatpush2.msra.mxu0 0.0
    %1644 = vmatprep.subr.mxu0 0.0
    %1645 = vmatpush2.msra.mxu0 0.0
    %1646 = vmatprep.subr.mxu0 0.0
    %1647 = vmatpush2.msra.mxu0 0.0
    %1648 = vmatprep.subr.mxu0 0.0
    %1649 = vmatpush2.msra.mxu0 0.0
    %1650 = vmatprep.subr.mxu0 0.0
    %1651 = vmatpush2.msra.mxu0 0.0
    %1652 = vmatprep.subr.mxu0 0.0
    %1653 = vmatpush2.msra.mxu0 0.0
    %1654 = vmatprep.subr.mxu0 0.0
    %1655 = vmatpush2.msra.mxu0 0.0
    %1656 = vmatprep.subr.mxu0 0.0
    %1657 = vmatpush2.msra.mxu0 0.0
    %1658 = vmatprep.subr.mxu0 0.0
    %1659 = vmatpush2.msra.mxu0 0.0
    %1660 = vmatprep.subr.mxu0 0.0
    %1661 = vmatpush2.msra.mxu0 0.0
    %1662 = vmatprep.subr.mxu0 0.0
    %1663 = vmatpush2.msra.mxu0 0.0
    %1664 = vmatprep.subr.mxu0 0.0
    %1665 = vmatpush2.msra.mxu0 0.0
    %1666 = vmatprep.subr.mxu0 0.0
    %1667 = vmatpush2.msra.mxu0 0.0
    %1668 = vmatprep.mubr.f32.mxu0 0.0
    %1669 = vmatmul.mubr.f32.gmra.mxu0 %v1596
    %v1670 = vpop.f32.mrf.mxu0
    %v1671 = vadd.f32 0.0, %v1670
    %v1672 = vpop.f32.mrf.mxu0
    %v1673 = vadd.f32 0.0, %v1672
    %1674 = vmatprep.mubr.f32.mxu0 0.0
    %1675 = vmatmul.mubr.f32.gmra.mxu0 %v1597
    %v1676 = vpop.f32.mrf.mxu0
    %v1677 = vadd.f32 0.0, %v1676
    %v1678 = vpop.f32.mrf.mxu0
    %v1679 = vadd.f32 0.0, %v1678
    %1680 = vdwg.mxu0
    %1681 = vmatprep.subr.mxu0 0.0
    %1682 = vmatpush1.msra.mxu0 %v160
    %1683 = vmatprep.subr.mxu0 0.0
    %1684 = vmatpush1.msra.mxu0 %v157
    %1685 = vmatprep.subr.mxu0 0.0
    %1686 = vmatpush1.msra.mxu0 %v154
    %1687 = vmatprep.subr.mxu0 0.0
    %1688 = vmatpush1.msra.mxu0 %v151
    %1689 = vmatprep.subr.mxu0 0.0
    %1690 = vmatpush1.msra.mxu0 %v148
    %1691 = vmatprep.subr.mxu0 0.0
    %1692 = vmatpush1.msra.mxu0 %v145
    %1693 = vmatprep.subr.mxu0 0.0
    %1694 = vmatpush1.msra.mxu0 %v142
    %1695 = vmatprep.subr.mxu0 0.0
    %1696 = vmatpush1.msra.mxu0 %v139
    %1697 = vmatprep.subr.mxu0 0.0
    %1698 = vmatpush1.msra.mxu0 %v136
    %1699 = vmatprep.subr.mxu0 0.0
    %1700 = vmatpush1.msra.mxu0 %v133
    %1701 = vmatprep.subr.mxu0 0.0
    %1702 = vmatpush1.msra.mxu0 %v130
    %1703 = vmatprep.subr.mxu0 0.0
    %1704 = vmatpush1.msra.mxu0 %v127
    %1705 = vmatprep.subr.mxu0 0.0
    %1706 = vmatpush1.msra.mxu0 %v124
    %1707 = vmatprep.subr.mxu0 0.0
    %1708 = vmatpush1.msra.mxu0 %v121
    %1709 = vmatprep.subr.mxu0 0.0
    %1710 = vmatpush1.msra.mxu0 %v118
    %1711 = vmatprep.subr.mxu0 0.0
    %1712 = vmatpush1.msra.mxu0 %v115
    %1713 = vmatprep.subr.mxu0 0.0
    %1714 = vmatpush2.msra.mxu0 0.0
    %1715 = vmatprep.subr.mxu0 0.0
    %1716 = vmatpush2.msra.mxu0 0.0
    %1717 = vmatprep.subr.mxu0 0.0
    %1718 = vmatpush2.msra.mxu0 0.0
    %1719 = vmatprep.subr.mxu0 0.0
    %1720 = vmatpush2.msra.mxu0 0.0
    %1721 = vmatprep.subr.mxu0 0.0
    %1722 = vmatpush2.msra.mxu0 0.0
    %1723 = vmatprep.subr.mxu0 0.0
    %1724 = vmatpush2.msra.mxu0 0.0
    %1725 = vmatprep.subr.mxu0 0.0
    %1726 = vmatpush2.msra.mxu0 0.0
    %1727 = vmatprep.subr.mxu0 0.0
    %1728 = vmatpush2.msra.mxu0 0.0
    %1729 = vmatprep.subr.mxu0 0.0
    %1730 = vmatpush2.msra.mxu0 0.0
    %1731 = vmatprep.subr.mxu0 0.0
    %1732 = vmatpush2.msra.mxu0 0.0
    %1733 = vmatprep.subr.mxu0 0.0
    %1734 = vmatpush2.msra.mxu0 0.0
    %1735 = vmatprep.subr.mxu0 0.0
    %1736 = vmatpush2.msra.mxu0 0.0
    %1737 = vmatprep.subr.mxu0 0.0
    %1738 = vmatpush2.msra.mxu0 0.0
    %1739 = vmatprep.subr.mxu0 0.0
    %1740 = vmatpush2.msra.mxu0 0.0
    %1741 = vmatprep.subr.mxu0 0.0
    %1742 = vmatpush2.msra.mxu0 0.0
    %1743 = vmatprep.subr.mxu0 0.0
    %1744 = vmatpush2.msra.mxu0 0.0
    %1745 = vmatprep.mubr.f32.mxu0 0.0
    %1746 = vmatmul.mubr.f32.gmra.mxu0 %v1596
    %v1747 = vpop.f32.mrf.mxu0
    %v1748 = vadd.f32 0.0, %v1747
    %v1749 = vpop.f32.mrf.mxu0
    %1750 = vmatprep.mubr.f32.mxu0 0.0
    %1751 = vmatmul.mubr.f32.gmra.mxu0 %v1597
    %v1752 = vpop.f32.mrf.mxu0
    %v1753 = vadd.f32 0.0, %v1752
    %v1754 = vpop.f32.mrf.mxu0
    %1755 = vdwg.mxu0
    %v1756 = vadd.f32 %v469, %v1671
    %v1757 = vadd.f32 %v473, %v1677
    %v1758 = vxor.u32 %v1756, 2147483648
    %v1759 = vxor.u32 %v1757, 2147483648
    %v1760 = vmul.f32 %v1758, 1.442695
    %v1761 = vpow.pop %v1760
    %v1762 = vmul.f32 %v1759, 1.442695
    %v1763 = vpow.pop %v1762
    %v1764 = vadd.f32 %v1761, 1.0
    %v1765 = vadd.f32 %v1763, 1.0
    %v1766 = vrcp.pop %v1764
    %v1767 = vmul.f32 1.0, %v1766
    %v1768 = vrcp.pop %v1765
    %v1769 = vmul.f32 1.0, %v1768
    %v1770 = vadd.f32 %v471, %v1673
    %v1771 = vadd.f32 %v475, %v1679
    %v1772 = vxor.u32 %v1770, 2147483648
    %v1773 = vxor.u32 %v1771, 2147483648
    %v1774 = vmul.f32 %v1772, 1.442695
    %v1775 = vpow.pop %v1774
    %v1776 = vmul.f32 %v1773, 1.442695
    %v1777 = vpow.pop %v1776
    %v1778 = vadd.f32 %v1775, 1.0
    %v1779 = vadd.f32 %v1777, 1.0
    %v1780 = vrcp.pop %v1778
    %v1781 = vmul.f32 1.0, %v1780
    %v1782 = vrcp.pop %v1779
    %v1783 = vmul.f32 1.0, %v1782
    %v1784 = vadd.f32 %v1748, %v167
    %v1785 = vadd.f32 %v1753, %v167
    %v1786 = vmul.f32 %v1767, %v1784
    %v1787 = vmul.f32 %v1769, %v1785
    %v1788 = vadd.f32 %v572, %v1786
    %v1789 = vadd.f32 %v575, %v1787
    %v1790 = vtanh.pop %v1788
    %v1791 = vtanh.pop %v1789
    %v1792 = vsub.f32 1.0, %v1781
    %v1793 = vsub.f32 1.0, %v1783
    %v1794 = vmul.f32 %v1792, %v1790
    %v1795 = vmul.f32 %v1793, %v1791
    %v1796 = vmul.f32 %v1781, %v1596
    %v1797 = vmul.f32 %v1783, %v1597
    %v1798 = vadd.f32 %v1794, %v1796
    %v1799 = vadd.f32 %v1795, %v1797
    %v1800 = vmul.f32 %v1798, %v174
    %v1801 = vmul.f32 %v1799, %v174
    %1802 = vadd.xlane.f32.xlu0 %v1800
    %v1803 = vpop.xlane.xlu0 %1802
    %1804 = vadd.xlane.f32.xlu0 %v1801
    %v1805 = vpop.xlane.xlu0 %1804
    %1806 = vmatprep.subr.mxu0 %v159
    %1807 = vmatpush1.msra.mxu0 %v158
    %1808 = vmatprep.subr.mxu0 %v156
    %1809 = vmatpush1.msra.mxu0 %v155
    %1810 = vmatprep.subr.mxu0 %v153
    %1811 = vmatpush1.msra.mxu0 %v152
    %1812 = vmatprep.subr.mxu0 %v150
    %1813 = vmatpush1.msra.mxu0 %v149
    %1814 = vmatprep.subr.mxu0 %v147
    %1815 = vmatpush1.msra.mxu0 %v146
    %1816 = vmatprep.subr.mxu0 %v144
    %1817 = vmatpush1.msra.mxu0 %v143
    %1818 = vmatprep.subr.mxu0 %v141
    %1819 = vmatpush1.msra.mxu0 %v140
    %1820 = vmatprep.subr.mxu0 %v138
    %1821 = vmatpush1.msra.mxu0 %v137
    %1822 = vmatprep.subr.mxu0 %v135
    %1823 = vmatpush1.msra.mxu0 %v134
    %1824 = vmatprep.subr.mxu0 %v132
    %1825 = vmatpush1.msra.mxu0 %v131
    %1826 = vmatprep.subr.mxu0 %v129
    %1827 = vmatpush1.msra.mxu0 %v128
    %1828 = vmatprep.subr.mxu0 %v126
    %1829 = vmatpush1.msra.mxu0 %v125
    %1830 = vmatprep.subr.mxu0 %v123
    %1831 = vmatpush1.msra.mxu0 %v122
    %1832 = vmatprep.subr.mxu0 %v120
    %1833 = vmatpush1.msra.mxu0 %v119
    %1834 = vmatprep.subr.mxu0 %v117
    %1835 = vmatpush1.msra.mxu0 %v116
    %1836 = vmatprep.subr.mxu0 %v114
    %1837 = vmatpush1.msra.mxu0 %v113
    %1838 = vmatprep.subr.mxu0 0.0
    %1839 = vmatpush2.msra.mxu0 0.0
    %1840 = vmatprep.subr.mxu0 0.0
    %1841 = vmatpush2.msra.mxu0 0.0
    %1842 = vmatprep.subr.mxu0 0.0
    %1843 = vmatpush2.msra.mxu0 0.0
    %1844 = vmatprep.subr.mxu0 0.0
    %1845 = vmatpush2.msra.mxu0 0.0
    %1846 = vmatprep.subr.mxu0 0.0
    %1847 = vmatpush2.msra.mxu0 0.0
    %1848 = vmatprep.subr.mxu0 0.0
    %1849 = vmatpush2.msra.mxu0 0.0
    %1850 = vmatprep.subr.mxu0 0.0
    %1851 = vmatpush2.msra.mxu0 0.0
    %1852 = vmatprep.subr.mxu0 0.0
    %1853 = vmatpush2.msra.mxu0 0.0
    %1854 = vmatprep.subr.mxu0 0.0
    %1855 = vmatpush2.msra.mxu0 0.0
    %1856 = vmatprep.subr.mxu0 0.0
    %1857 = vmatpush2.msra.mxu0 0.0
    %1858 = vmatprep.subr.mxu0 0.0
    %1859 = vmatpush2.msra.mxu0 0.0
    %1860 = vmatprep.subr.mxu0 0.0
    %1861 = vmatpush2.msra.mxu0 0.0
    %1862 = vmatprep.subr.mxu0 0.0
    %1863 = vmatpush2.msra.mxu0 0.0
    %1864 = vmatprep.subr.mxu0 0.0
    %1865 = vmatpush2.msra.mxu0 0.0
    %1866 = vmatprep.subr.mxu0 0.0
    %1867 = vmatpush2.msra.mxu0 0.0
    %1868 = vmatprep.subr.mxu0 0.0
    %1869 = vmatpush2.msra.mxu0 0.0
    %1870 = vmatprep.mubr.f32.mxu0 0.0
    %1871 = vmatmul.mubr.f32.gmra.mxu0 %v1798
    %v1872 = vpop.f32.mrf.mxu0
    %v1873 = vadd.f32 0.0, %v1872
    %v1874 = vpop.f32.mrf.mxu0
    %v1875 = vadd.f32 0.0, %v1874
    %1876 = vmatprep.mubr.f32.mxu0 0.0
    %1877 = vmatmul.mubr.f32.gmra.mxu0 %v1799
    %v1878 = vpop.f32.mrf.mxu0
    %v1879 = vadd.f32 0.0, %v1878
    %v1880 = vpop.f32.mrf.mxu0
    %v1881 = vadd.f32 0.0, %v1880
    %1882 = vdwg.mxu0
    %1883 = vmatprep.subr.mxu0 0.0
    %1884 = vmatpush1.msra.mxu0 %v160
    %1885 = vmatprep.subr.mxu0 0.0
    %1886 = vmatpush1.msra.mxu0 %v157
    %1887 = vmatprep.subr.mxu0 0.0
    %1888 = vmatpush1.msra.mxu0 %v154
    %1889 = vmatprep.subr.mxu0 0.0
    %1890 = vmatpush1.msra.mxu0 %v151
    %1891 = vmatprep.subr.mxu0 0.0
    %1892 = vmatpush1.msra.mxu0 %v148
    %1893 = vmatprep.subr.mxu0 0.0
    %1894 = vmatpush1.msra.mxu0 %v145
    %1895 = vmatprep.subr.mxu0 0.0
    %1896 = vmatpush1.msra.mxu0 %v142
    %1897 = vmatprep.subr.mxu0 0.0
    %1898 = vmatpush1.msra.mxu0 %v139
    %1899 = vmatprep.subr.mxu0 0.0
    %1900 = vmatpush1.msra.mxu0 %v136
    %1901 = vmatprep.subr.mxu0 0.0
    %1902 = vmatpush1.msra.mxu0 %v133
    %1903 = vmatprep.subr.mxu0 0.0
    %1904 = vmatpush1.msra.mxu0 %v130
    %1905 = vmatprep.subr.mxu0 0.0
    %1906 = vmatpush1.msra.mxu0 %v127
    %1907 = vmatprep.subr.mxu0 0.0
    %1908 = vmatpush1.msra.mxu0 %v124
    %1909 = vmatprep.subr.mxu0 0.0
    %1910 = vmatpush1.msra.mxu0 %v121
    %1911 = vmatprep.subr.mxu0 0.0
    %1912 = vmatpush1.msra.mxu0 %v118
    %1913 = vmatprep.subr.mxu0 0.0
    %1914 = vmatpush1.msra.mxu0 %v115
    %1915 = vmatprep.subr.mxu0 0.0
    %1916 = vmatpush2.msra.mxu0 0.0
    %1917 = vmatprep.subr.mxu0 0.0
    %1918 = vmatpush2.msra.mxu0 0.0
    %1919 = vmatprep.subr.mxu0 0.0
    %1920 = vmatpush2.msra.mxu0 0.0
    %1921 = vmatprep.subr.mxu0 0.0
    %1922 = vmatpush2.msra.mxu0 0.0
    %1923 = vmatprep.subr.mxu0 0.0
    %1924 = vmatpush2.msra.mxu0 0.0
    %1925 = vmatprep.subr.mxu0 0.0
    %1926 = vmatpush2.msra.mxu0 0.0
    %1927 = vmatprep.subr.mxu0 0.0
    %1928 = vmatpush2.msra.mxu0 0.0
    %1929 = vmatprep.subr.mxu0 0.0
    %1930 = vmatpush2.msra.mxu0 0.0
    %1931 = vmatprep.subr.mxu0 0.0
    %1932 = vmatpush2.msra.mxu0 0.0
    %1933 = vmatprep.subr.mxu0 0.0
    %1934 = vmatpush2.msra.mxu0 0.0
    %1935 = vmatprep.subr.mxu0 0.0
    %1936 = vmatpush2.msra.mxu0 0.0
    %1937 = vmatprep.subr.mxu0 0.0
    %1938 = vmatpush2.msra.mxu0 0.0
    %1939 = vmatprep.subr.mxu0 0.0
    %1940 = vmatpush2.msra.mxu0 0.0
    %1941 = vmatprep.subr.mxu0 0.0
    %1942 = vmatpush2.msra.mxu0 0.0
    %1943 = vmatprep.subr.mxu0 0.0
    %1944 = vmatpush2.msra.mxu0 0.0
    %1945 = vmatprep.subr.mxu0 0.0
    %1946 = vmatpush2.msra.mxu0 0.0
    %1947 = vmatprep.mubr.f32.mxu0 0.0
    %1948 = vmatmul.mubr.f32.gmra.mxu0 %v1798
    %v1949 = vpop.f32.mrf.mxu0
    %v1950 = vadd.f32 0.0, %v1949
    %v1951 = vpop.f32.mrf.mxu0
    %1952 = vmatprep.mubr.f32.mxu0 0.0
    %1953 = vmatmul.mubr.f32.gmra.mxu0 %v1799
    %v1954 = vpop.f32.mrf.mxu0
    %v1955 = vadd.f32 0.0, %v1954
    %v1956 = vpop.f32.mrf.mxu0
    %1957 = vdwg.mxu0
    %v1958 = vadd.f32 %v479, %v1873
    %v1959 = vadd.f32 %v483, %v1879
    %v1960 = vxor.u32 %v1958, 2147483648
    %v1961 = vxor.u32 %v1959, 2147483648
    %v1962 = vmul.f32 %v1960, 1.442695
    %v1963 = vpow.pop %v1962
    %v1964 = vmul.f32 %v1961, 1.442695
    %v1965 = vpow.pop %v1964
    %v1966 = vadd.f32 %v1963, 1.0
    %v1967 = vadd.f32 %v1965, 1.0
    %v1968 = vrcp.pop %v1966
    %v1969 = vmul.f32 1.0, %v1968
    %v1970 = vrcp.pop %v1967
    %v1971 = vmul.f32 1.0, %v1970
    %v1972 = vadd.f32 %v481, %v1875
    %v1973 = vadd.f32 %v485, %v1881
    %v1974 = vxor.u32 %v1972, 2147483648
    %v1975 = vxor.u32 %v1973, 2147483648
    %v1976 = vmul.f32 %v1974, 1.442695
    %v1977 = vpow.pop %v1976
    %v1978 = vmul.f32 %v1975, 1.442695
    %v1979 = vpow.pop %v1978
    %v1980 = vadd.f32 %v1977, 1.0
    %v1981 = vadd.f32 %v1979, 1.0
    %v1982 = vrcp.pop %v1980
    %v1983 = vmul.f32 1.0, %v1982
    %v1984 = vrcp.pop %v1981
    %v1985 = vmul.f32 1.0, %v1984
    %v1986 = vadd.f32 %v1950, %v167
    %v1987 = vadd.f32 %v1955, %v167
    %v1988 = vmul.f32 %v1969, %v1986
    %v1989 = vmul.f32 %v1971, %v1987
    %v1990 = vadd.f32 %v580, %v1988
    %v1991 = vadd.f32 %v583, %v1989
    %v1992 = vtanh.pop %v1990
    %v1993 = vtanh.pop %v1991
    %v1994 = vsub.f32 1.0, %v1983
    %v1995 = vsub.f32 1.0, %v1985
    %v1996 = vmul.f32 %v1994, %v1992
    %v1997 = vmul.f32 %v1995, %v1993
    %v1998 = vmul.f32 %v1983, %v1798
    %v1999 = vmul.f32 %v1985, %v1799
    %v2000 = vadd.f32 %v1996, %v1998
    %v2001 = vadd.f32 %v1997, %v1999
    %v2002 = vmul.f32 %v2000, %v174
    %v2003 = vmul.f32 %v2001, %v174
    %2004 = vadd.xlane.f32.xlu0 %v2002
    %v2005 = vpop.xlane.xlu0 %2004
    %2006 = vadd.xlane.f32.xlu0 %v2003
    %v2007 = vpop.xlane.xlu0 %2006
    %2008 = vmatprep.subr.mxu0 %v159
    %2009 = vmatpush1.msra.mxu0 %v158
    %2010 = vmatprep.subr.mxu0 %v156
    %2011 = vmatpush1.msra.mxu0 %v155
    %2012 = vmatprep.subr.mxu0 %v153
    %2013 = vmatpush1.msra.mxu0 %v152
    %2014 = vmatprep.subr.mxu0 %v150
    %2015 = vmatpush1.msra.mxu0 %v149
    %2016 = vmatprep.subr.mxu0 %v147
    %2017 = vmatpush1.msra.mxu0 %v146
    %2018 = vmatprep.subr.mxu0 %v144
    %2019 = vmatpush1.msra.mxu0 %v143
    %2020 = vmatprep.subr.mxu0 %v141
    %2021 = vmatpush1.msra.mxu0 %v140
    %2022 = vmatprep.subr.mxu0 %v138
    %2023 = vmatpush1.msra.mxu0 %v137
    %2024 = vmatprep.subr.mxu0 %v135
    %2025 = vmatpush1.msra.mxu0 %v134
    %2026 = vmatprep.subr.mxu0 %v132
    %2027 = vmatpush1.msra.mxu0 %v131
    %2028 = vmatprep.subr.mxu0 %v129
    %2029 = vmatpush1.msra.mxu0 %v128
    %2030 = vmatprep.subr.mxu0 %v126
    %2031 = vmatpush1.msra.mxu0 %v125
    %2032 = vmatprep.subr.mxu0 %v123
    %2033 = vmatpush1.msra.mxu0 %v122
    %2034 = vmatprep.subr.mxu0 %v120
    %2035 = vmatpush1.msra.mxu0 %v119
    %2036 = vmatprep.subr.mxu0 %v117
    %2037 = vmatpush1.msra.mxu0 %v116
    %2038 = vmatprep.subr.mxu0 %v114
    %2039 = vmatpush1.msra.mxu0 %v113
    %2040 = vmatprep.subr.mxu0 0.0
    %2041 = vmatpush2.msra.mxu0 0.0
    %2042 = vmatprep.subr.mxu0 0.0
    %2043 = vmatpush2.msra.mxu0 0.0
    %2044 = vmatprep.subr.mxu0 0.0
    %2045 = vmatpush2.msra.mxu0 0.0
    %2046 = vmatprep.subr.mxu0 0.0
    %2047 = vmatpush2.msra.mxu0 0.0
    %2048 = vmatprep.subr.mxu0 0.0
    %2049 = vmatpush2.msra.mxu0 0.0
    %2050 = vmatprep.subr.mxu0 0.0
    %2051 = vmatpush2.msra.mxu0 0.0
    %2052 = vmatprep.subr.mxu0 0.0
    %2053 = vmatpush2.msra.mxu0 0.0
    %2054 = vmatprep.subr.mxu0 0.0
    %2055 = vmatpush2.msra.mxu0 0.0
    %2056 = vmatprep.subr.mxu0 0.0
    %2057 = vmatpush2.msra.mxu0 0.0
    %2058 = vmatprep.subr.mxu0 0.0
    %2059 = vmatpush2.msra.mxu0 0.0
    %2060 = vmatprep.subr.mxu0 0.0
    %2061 = vmatpush2.msra.mxu0 0.0
    %2062 = vmatprep.subr.mxu0 0.0
    %2063 = vmatpush2.msra.mxu0 0.0
    %2064 = vmatprep.subr.mxu0 0.0
    %2065 = vmatpush2.msra.mxu0 0.0
    %2066 = vmatprep.subr.mxu0 0.0
    %2067 = vmatpush2.msra.mxu0 0.0
    %2068 = vmatprep.subr.mxu0 0.0
    %2069 = vmatpush2.msra.mxu0 0.0
    %2070 = vmatprep.subr.mxu0 0.0
    %2071 = vmatpush2.msra.mxu0 0.0
    %2072 = vmatprep.mubr.f32.mxu0 0.0
    %2073 = vmatmul.mubr.f32.gmra.mxu0 %v2000
    %v2074 = vpop.f32.mrf.mxu0
    %v2075 = vadd.f32 0.0, %v2074
    %v2076 = vpop.f32.mrf.mxu0
    %v2077 = vadd.f32 0.0, %v2076
    %2078 = vmatprep.mubr.f32.mxu0 0.0
    %2079 = vmatmul.mubr.f32.gmra.mxu0 %v2001
    %v2080 = vpop.f32.mrf.mxu0
    %v2081 = vadd.f32 0.0, %v2080
    %v2082 = vpop.f32.mrf.mxu0
    %v2083 = vadd.f32 0.0, %v2082
    %2084 = vdwg.mxu0
    %2085 = vmatprep.subr.mxu0 0.0
    %2086 = vmatpush1.msra.mxu0 %v160
    %2087 = vmatprep.subr.mxu0 0.0
    %2088 = vmatpush1.msra.mxu0 %v157
    %2089 = vmatprep.subr.mxu0 0.0
    %2090 = vmatpush1.msra.mxu0 %v154
    %2091 = vmatprep.subr.mxu0 0.0
    %2092 = vmatpush1.msra.mxu0 %v151
    %2093 = vmatprep.subr.mxu0 0.0
    %2094 = vmatpush1.msra.mxu0 %v148
    %2095 = vmatprep.subr.mxu0 0.0
    %2096 = vmatpush1.msra.mxu0 %v145
    %2097 = vmatprep.subr.mxu0 0.0
    %2098 = vmatpush1.msra.mxu0 %v142
    %2099 = vmatprep.subr.mxu0 0.0
    %2100 = vmatpush1.msra.mxu0 %v139
    %2101 = vmatprep.subr.mxu0 0.0
    %2102 = vmatpush1.msra.mxu0 %v136
    %2103 = vmatprep.subr.mxu0 0.0
    %2104 = vmatpush1.msra.mxu0 %v133
    %2105 = vmatprep.subr.mxu0 0.0
    %2106 = vmatpush1.msra.mxu0 %v130
    %2107 = vmatprep.subr.mxu0 0.0
    %2108 = vmatpush1.msra.mxu0 %v127
    %2109 = vmatprep.subr.mxu0 0.0
    %2110 = vmatpush1.msra.mxu0 %v124
    %2111 = vmatprep.subr.mxu0 0.0
    %2112 = vmatpush1.msra.mxu0 %v121
    %2113 = vmatprep.subr.mxu0 0.0
    %2114 = vmatpush1.msra.mxu0 %v118
    %2115 = vmatprep.subr.mxu0 0.0
    %2116 = vmatpush1.msra.mxu0 %v115
    %2117 = vmatprep.subr.mxu0 0.0
    %2118 = vmatpush2.msra.mxu0 0.0
    %2119 = vmatprep.subr.mxu0 0.0
    %2120 = vmatpush2.msra.mxu0 0.0
    %2121 = vmatprep.subr.mxu0 0.0
    %2122 = vmatpush2.msra.mxu0 0.0
    %2123 = vmatprep.subr.mxu0 0.0
    %2124 = vmatpush2.msra.mxu0 0.0
    %2125 = vmatprep.subr.mxu0 0.0
    %2126 = vmatpush2.msra.mxu0 0.0
    %2127 = vmatprep.subr.mxu0 0.0
    %2128 = vmatpush2.msra.mxu0 0.0
    %2129 = vmatprep.subr.mxu0 0.0
    %2130 = vmatpush2.msra.mxu0 0.0
    %2131 = vmatprep.subr.mxu0 0.0
    %2132 = vmatpush2.msra.mxu0 0.0
    %2133 = vmatprep.subr.mxu0 0.0
    %2134 = vmatpush2.msra.mxu0 0.0
    %2135 = vmatprep.subr.mxu0 0.0
    %2136 = vmatpush2.msra.mxu0 0.0
    %2137 = vmatprep.subr.mxu0 0.0
    %2138 = vmatpush2.msra.mxu0 0.0
    %2139 = vmatprep.subr.mxu0 0.0
    %2140 = vmatpush2.msra.mxu0 0.0
    %2141 = vmatprep.subr.mxu0 0.0
    %2142 = vmatpush2.msra.mxu0 0.0
    %2143 = vmatprep.subr.mxu0 0.0
    %2144 = vmatpush2.msra.mxu0 0.0
    %2145 = vmatprep.subr.mxu0 0.0
    %2146 = vmatpush2.msra.mxu0 0.0
    %2147 = vmatprep.subr.mxu0 0.0
    %2148 = vmatpush2.msra.mxu0 0.0
    %2149 = vmatprep.mubr.f32.mxu0 0.0
    %2150 = vmatmul.mubr.f32.gmra.mxu0 %v2000
    %v2151 = vpop.f32.mrf.mxu0
    %v2152 = vadd.f32 0.0, %v2151
    %v2153 = vpop.f32.mrf.mxu0
    %2154 = vmatprep.mubr.f32.mxu0 0.0
    %2155 = vmatmul.mubr.f32.gmra.mxu0 %v2001
    %v2156 = vpop.f32.mrf.mxu0
    %v2157 = vadd.f32 0.0, %v2156
    %v2158 = vpop.f32.mrf.mxu0
    %2159 = vdwg.mxu0
    %v2160 = vadd.f32 %v489, %v2075
    %v2161 = vadd.f32 %v493, %v2081
    %v2162 = vxor.u32 %v2160, 2147483648
    %v2163 = vxor.u32 %v2161, 2147483648
    %v2164 = vmul.f32 %v2162, 1.442695
    %v2165 = vpow.pop %v2164
    %v2166 = vmul.f32 %v2163, 1.442695
    %v2167 = vpow.pop %v2166
    %v2168 = vadd.f32 %v2165, 1.0
    %v2169 = vadd.f32 %v2167, 1.0
    %v2170 = vrcp.pop %v2168
    %v2171 = vmul.f32 1.0, %v2170
    %v2172 = vrcp.pop %v2169
    %v2173 = vmul.f32 1.0, %v2172
    %v2174 = vadd.f32 %v491, %v2077
    %v2175 = vadd.f32 %v495, %v2083
    %v2176 = vxor.u32 %v2174, 2147483648
    %v2177 = vxor.u32 %v2175, 2147483648
    %v2178 = vmul.f32 %v2176, 1.442695
    %v2179 = vpow.pop %v2178
    %v2180 = vmul.f32 %v2177, 1.442695
    %v2181 = vpow.pop %v2180
    %v2182 = vadd.f32 %v2179, 1.0
    %v2183 = vadd.f32 %v2181, 1.0
    %v2184 = vrcp.pop %v2182
    %v2185 = vmul.f32 1.0, %v2184
    %v2186 = vrcp.pop %v2183
    %v2187 = vmul.f32 1.0, %v2186
    %v2188 = vadd.f32 %v2152, %v167
    %v2189 = vadd.f32 %v2157, %v167
    %v2190 = vmul.f32 %v2171, %v2188
    %v2191 = vmul.f32 %v2173, %v2189
    %v2192 = vadd.f32 %v588, %v2190
    %v2193 = vadd.f32 %v591, %v2191
    %v2194 = vtanh.pop %v2192
    %v2195 = vtanh.pop %v2193
    %v2196 = vsub.f32 1.0, %v2185
    %v2197 = vsub.f32 1.0, %v2187
    %v2198 = vmul.f32 %v2196, %v2194
    %v2199 = vmul.f32 %v2197, %v2195
    %v2200 = vmul.f32 %v2185, %v2000
    %v2201 = vmul.f32 %v2187, %v2001
    %v2202 = vadd.f32 %v2198, %v2200
    %v2203 = vadd.f32 %v2199, %v2201
    %v2204 = vmul.f32 %v2202, %v174
    %v2205 = vmul.f32 %v2203, %v174
    %2206 = vadd.xlane.f32.xlu0 %v2204
    %v2207 = vpop.xlane.xlu0 %2206
    %2208 = vadd.xlane.f32.xlu0 %v2205
    %v2209 = vpop.xlane.xlu0 %2208
    %vm2210 = vcmask 7168
    %v2211 = vsel %vm2210, %v793, %v995
    %v2212 = vsel %vm2210, %v795, %v997
    %vm2213 = vcmask 15360
    %v2214 = vsel %vm2213, %v2211, %v1197
    %v2215 = vsel %vm2213, %v2212, %v1199
    %vm2216 = vcmask 23552
    %v2217 = vsel %vm2216, %v2214, %v1399
    %v2218 = vsel %vm2216, %v2215, %v1401
    %vm2219 = vcmask 31744
    %v2220 = vsel %vm2219, %v2217, %v1601
    %v2221 = vsel %vm2219, %v2218, %v1603
    %vm2222 = vcmask 39936
    %v2223 = vsel %vm2222, %v2220, %v1803
    %v2224 = vsel %vm2222, %v2221, %v1805
    %vm2225 = vcmask 48128
    %v2226 = vsel %vm2225, %v2223, %v2005
    %v2227 = vsel %vm2225, %v2224, %v2007
    %vm2228 = vcmask 56320
    %v2229 = vsel %vm2228, %v2226, %v2207
    %v2230 = vsel %vm2228, %v2227, %v2209
    %2231 = vxpose.xlu0.b32.start [1/16] %v2229, 128
    %2232 = vxpose.xlu0.b32.cont [2/16] %v2230, 128
    %2233 = vxpose.xlu0.b32.cont [3/16] 0.0, 128
    %2234 = vxpose.xlu0.b32.cont [4/16] 0.0, 128
    %2235 = vxpose.xlu0.b32.cont [5/16] 0.0, 128
    %2236 = vxpose.xlu0.b32.cont [6/16] 0.0, 128
    %2237 = vxpose.xlu0.b32.cont [7/16] 0.0, 128
    %2238 = vxpose.xlu0.b32.cont [8/16] 0.0, 128
    %2239 = vxpose.xlu0.b32.cont [9/16] 0.0, 128
    %2240 = vxpose.xlu0.b32.cont [10/16] 0.0, 128
    %2241 = vxpose.xlu0.b32.cont [11/16] 0.0, 128
    %2242 = vxpose.xlu0.b32.cont [12/16] 0.0, 128
    %2243 = vxpose.xlu0.b32.cont [13/16] 0.0, 128
    %2244 = vxpose.xlu0.b32.cont [14/16] 0.0, 128
    %2245 = vxpose.xlu0.b32.cont [15/16] 0.0, 128
    %2246 = vxpose.xlu0.b32.end [16/16] 0.0, 128
    %v2247 = vpop.trf.xlu0
    %v2248 = vpop.trf.xlu0
    %v2249 = vpop.trf.xlu0
    %v2250 = vpop.trf.xlu0
    %v2251 = vpop.trf.xlu0
    %v2252 = vpop.trf.xlu0
    %v2253 = vpop.trf.xlu0
    %v2254 = vpop.trf.xlu0
    %v2255 = vpop.trf.xlu0
    %v2256 = vpop.trf.xlu0
    %v2257 = vpop.trf.xlu0
    %v2258 = vpop.trf.xlu0
    %v2259 = vpop.trf.xlu0
    %v2260 = vpop.trf.xlu0
    %v2261 = vpop.trf.xlu0
    %v2262 = vpop.trf.xlu0
    %v2263 = vld [vmem:[#allocation2] sm:$0xff]
    %vm2264 = vcmp.gt.s32.totalorder %v2263, 0
    %v2265 = vsel %vm2264, %v2247, -9e+15
    %vm2266 = vcmask 130048
    %v2267 = vsel %vm2266, %v2265, -inf
    %v2268 = vrot.slane %v2267, 4
    %v2269 = vmax.f32 %v2267, %v2268
    %v2270 = vrot.slane %v2269, 2
    %v2271 = vmax.f32 %v2269, %v2270
    %v2272 = vrot.slane %v2271, 1
    %v2273 = vmax.f32 %v2271, %v2272
    %v2274 = vsub.f32 %v2265, %v2273
    %v2275 = vmul.f32 %v2274, 1.442695
    %v2276 = vpow.pop %v2275
    %v2277 = vsel %vm2266, %v2276, 0.0
    %v2278 = vrot.slane %v2277, 4
    %v2279 = vadd.f32 %v2277, %v2278
    %v2280 = vrot.slane %v2279, 2
    %v2281 = vadd.f32 %v2279, %v2280
    %v2282 = vrot.slane %v2281, 1
    %v2283 = vadd.f32 %v2281, %v2282
    %v2284 = vrcp.pop %v2283
    %v2285 = vmul.f32 %v2276, %v2284
    %2286 = vst.msk [vmem:[#allocation10] sm:$0xff] %vm2266, %v2285
    // Predicated region
    $region46: #{tpu_custom_call.1} parent=1 // pred_check
      _
    $region47: #{tpu_custom_call.1} parent=1 // pred_check_branch
      %2288 = sbr.rel (0) target = $region49
    $region48: #{tpu_custom_call.1} parent=1 // pred_region
      %s2290 = ssub.s32 128, 128
      %2291 = vsyncadd [#allocation4], %s2290
      %s2293 = sshll.u32 [#allocation10], 4
      %s2294 = int_to_ptr.vmem [resolvable:$true] %s2293
      %2296 = dma.vmem_to_hbm [thread:$0]  %s2294, 128, %s7, [#allocation4]
    $region49: #{tpu_custom_call.1} parent=1 // pred_fallthru
      _
    // Predicated region
    $region50: #{tpu_custom_call.1} parent=1 // pred_check
      _
    $region51: #{tpu_custom_call.1} parent=1 // pred_check_branch
      %2298 = sbr.rel (0) target = $region53
    $region52: #{tpu_custom_call.1} parent=1 // pred_region
      %2299 = dma.done [#allocation4], 128
    $region53: #{tpu_custom_call.1} parent=1 // pred_fallthru
      _
    %2300 = vsyncpa [#allocation3], 1
    %2301 = vsyncpa [#allocation6], 1
    %2302 = vsyncpa [#allocation9], 1
    %2303 = vsyncpa [#allocation4], 1

</llo_original>
